<compile_context>
chip_gen: v7x
topology: tpu7x:2x2x1
jax: 0.10.0
libtpu: 0.0.40
codegen_flags: <defaults>
</compile_context>

<pallas_src>
import math
from functools import partial

import jax
import jax.numpy as jnp
from jax.experimental import pallas as pl
from jax.experimental.pallas import tpu as pltpu

LN_EPS = 1e-12       # espnet/funasr LayerNorm eps
NEG_BIG = 1e30       # additive mask bias magnitude


def _layer_norm(x, gamma, beta):
    mu = jnp.mean(x, axis=-1, keepdims=True)
    var = jnp.mean(jnp.square(x - mu), axis=-1, keepdims=True)
    return (x - mu) * jax.lax.rsqrt(var + LN_EPS) * gamma + beta


# ---------------------------- fused Pallas kernel ----------------------------

def _fused_encoder_kernel(x0_ref, valid_ref,
                          wqkv_ref, bqkv_ref, wo_ref, bo_ref,
                          w1_ref, b1_ref, w2_ref, b2_ref,
                          g1_ref, be1_ref, g2_ref, be2_ref,
                          ag_ref, ab_ref,
                          out_ref,
                          qkv_vmem, ctx_vmem,
                          *, batch, num_heads):
    layer = pl.program_id(1)
    last = pl.num_programs(1) - 1
    bf16 = jnp.bfloat16

    # layer 0: load scaled-embedding + PE (computed in wrapper) into the resident out block
    @pl.when(layer == 0)
    def _():
        out_ref[...] = x0_ref[...]

    x = out_ref[...]                     # (Bc*L, D) f32, carried across layers in VMEM
    BL, D = x.shape
    Bc, H = batch, num_heads
    L = BL // Bc
    dk = D // H
    inv_sqrt_dk = jnp.float32(1.0 / math.sqrt(dk))

    valid = valid_ref[...]                               # (Bc, 1, L), 1.0 = valid key
    bias = (valid - 1.0) * jnp.float32(NEG_BIG)          # 0 / -1e30 additive mask

    # ---------------- multi-head self-attention (normalize_before=True) ----------------
    residual = x
    xn = _layer_norm(x, g1_ref[0], be1_ref[0])           # f32 (BL, D)
    # one dense lane-wide projection for Q,K,V together (MXU-friendly, no replication)
    qkv_vmem[...] = jnp.dot(xn.astype(bf16), wqkv_ref[0],
                            preferred_element_type=jnp.float32) + bqkv_ref[0]

    # per-head attention via static lane slices of the VMEM qkv buffer (no transposes)
    for h in range(H):
        qh = (qkv_vmem[:, h * dk:(h + 1) * dk] * inv_sqrt_dk).reshape(Bc, L, dk)
        kh = qkv_vmem[:, D + h * dk:D + (h + 1) * dk].reshape(Bc, L, dk)
        vh = qkv_vmem[:, 2 * D + h * dk:2 * D + (h + 1) * dk].reshape(Bc, L, dk)

        s = jnp.einsum('bqd,bkd->bqk', qh.astype(bf16), kh.astype(bf16),
                       preferred_element_type=jnp.float32) + bias       # (Bc, L, L)
        m = jnp.max(s, axis=-1, keepdims=True)
        p = jnp.exp(s - m)
        inv = pl.reciprocal(jnp.sum(p, axis=-1, keepdims=True), approx=True)
        attn = p * inv * valid            # post-softmax zeroing: PyTorch masked_fill parity

        ctxh = jnp.einsum('bqk,bkd->bqd', attn.astype(bf16), vh.astype(bf16),
                          preferred_element_type=jnp.float32)           # (Bc, L, dk)
        ctx_vmem[:, h * dk:(h + 1) * dk] = ctxh.reshape(BL, dk)

    # one dense output projection on the re-assembled context
    att_out = jnp.dot(ctx_vmem[...].astype(bf16), wo_ref[0],
                      preferred_element_type=jnp.float32) + bo_ref[0]
    x = residual + att_out               # dropout: eval no-op

    # ---------------- position-wise feed-forward ----------------
    residual = x
    xn2 = _layer_norm(x, g2_ref[0], be2_ref[0])
    h1 = jnp.maximum(jnp.dot(xn2.astype(bf16), w1_ref[0],
                             preferred_element_type=jnp.float32) + b1_ref[0], 0.0)
    ff = jnp.dot(h1.astype(bf16), w2_ref[0],
                 preferred_element_type=jnp.float32) + b2_ref[0]
    x = residual + ff

    # carry activation / final after_norm (single HBM writeback per batch chunk)
    @pl.when(layer != last)
    def _():
        out_ref[...] = x

    @pl.when(layer == last)
    def _():
        out_ref[...] = _layer_norm(x, ag_ref[...], ab_ref[...])

    # TODO(synk): for long sequences, tile the query dim (flash-style key loop) so the
    # (Bc, L, L) score block stays within VMEM; unnecessary at these sizes.


# ---------------------------- pallas_call wrapper ----------------------------

_LAYER_WEIGHTS = ("wqkv", "bqkv", "wo", "bo", "w1", "b1", "w2", "b2",
                  "g1", "be1", "g2", "be2")


def _vmem_limit_bytes(Bc, L, D, U):
    BLc = Bc * L
    act = 2 * BLc * D * 4                                    # x0 + out resident blocks
    scratch = BLc * 4 * D * 4                                # qkv + ctx VMEM scratch
    live = 3 * Bc * L * L * 4 + BLc * 3 * D * 4 + BLc * U * 4
    w_layer = (4 * D * D + 2 * D * U) * 2 + (14 * D + U) * 4  # bf16 mats + f32 bias/LN
    total = act + scratch + live + 2 * w_layer               # double-buffered weight stream
    return int(min(max(2 * total, 32 << 20), 64 << 20))      # cap at v7x physical VMEM


def fused_text_encoder(x0, valid, stacked, after_g, after_b, *,
                       batch, num_heads, batch_chunks):
    BL, D = x0.shape
    Bc = batch // batch_chunks
    L = BL // batch
    U = stacked["w1"].shape[2]
    NB = stacked["wqkv"].shape[0]

    x_spec = pl.BlockSpec((Bc * L, D), lambda c, l: (c, 0))
    valid_spec = pl.BlockSpec((Bc, 1, L), lambda c, l: (c, 0, 0))

    def layer_spec(arr):      # stream one layer's block per inner grid step
        nd = arr.ndim
        return pl.BlockSpec((1,) + arr.shape[1:],
                            lambda c, l, _n=nd: (l,) + (0,) * (_n - 1))

    def const_spec(arr):      # resident across the whole grid
        nd = arr.ndim
        return pl.BlockSpec(arr.shape, lambda c, l, _n=nd: (0,) * _n)

    weights = [stacked[k] for k in _LAYER_WEIGHTS]
    in_specs = ([x_spec, valid_spec]
                + [layer_spec(w) for w in weights]
                + [const_spec(after_g), const_spec(after_b)])

    return pl.pallas_call(
        partial(_fused_encoder_kernel, batch=Bc, num_heads=num_heads),
        out_shape=jax.ShapeDtypeStruct((BL, D), jnp.float32),
        grid=(batch_chunks, NB),
        in_specs=in_specs,
        out_specs=x_spec,
        scratch_shapes=[pltpu.VMEM((Bc * L, 3 * D), jnp.float32),
                        pltpu.VMEM((Bc * L, D), jnp.float32)],
        compiler_params=pltpu.CompilerParams(
            dimension_semantics=("parallel", "arbitrary"),
            vmem_limit_bytes=_vmem_limit_bytes(Bc, L, D, U)),
    )(x0, valid, *weights, after_g, after_b)


# ---------------------------- parameters / glue ----------------------------

def positional_encoding(L, D):
    position = jnp.arange(L, dtype=jnp.float32)[:, None]
    div_term = jnp.exp(jnp.arange(0, D, 2, dtype=jnp.float32) * -(math.log(10000.0) / D))
    pe = jnp.zeros((L, D), jnp.float32)
    pe = pe.at[:, 0::2].set(jnp.sin(position * div_term))
    pe = pe.at[:, 1::2].set(jnp.cos(position * div_term))
    return pe


def init_params(key, vocab, D, U, num_blocks):
    keys = jax.random.split(key, 1 + num_blocks)
    params = {"embed_table": 0.1 * jax.random.normal(keys[0], (vocab, D), jnp.float32)}

    def lin(k, shp):
        return 0.1 * jax.random.normal(k, shp, jnp.float32)

    layers = []
    for l in range(num_blocks):
        ks = jax.random.split(keys[1 + l], 12)
        layers.append({
            "wq": lin(ks[0], (D, D)), "bq": lin(ks[1], (D,)),
            "wk": lin(ks[2], (D, D)), "bk": lin(ks[3], (D,)),
            "wv": lin(ks[4], (D, D)), "bv": lin(ks[5], (D,)),
            "wo": lin(ks[6], (D, D)), "bo": lin(ks[7], (D,)),
            "w1": lin(ks[8], (D, U)), "b1": lin(ks[9], (U,)),
            "w2": lin(ks[10], (U, D)), "b2": lin(ks[11], (D,)),
            "g1": jnp.ones((D,), jnp.float32), "be1": jnp.zeros((D,), jnp.float32),
            "g2": jnp.ones((D,), jnp.float32), "be2": jnp.zeros((D,), jnp.float32),
        })
    params["layers"] = layers
    params["after_g"] = jnp.ones((D,), jnp.float32)
    params["after_b"] = jnp.zeros((D,), jnp.float32)
    return params


def prepare_stacked(layers):
    """Stack per-layer weights along a leading layer axis; QKV concatenated lane-dense;
    matmul weights stored bf16 (halved DMA / VMEM, fast MXU path)."""
    NB = len(layers)
    D = layers[0]["wq"].shape[0]
    U = layers[0]["w1"].shape[1]
    stack = lambda n: jnp.stack([lp[n] for lp in layers], axis=0)

    wqkv = jnp.concatenate([stack("wq"), stack("wk"), stack("wv")], axis=-1)   # (NB, D, 3D)
    bqkv = jnp.concatenate([stack("bq"), stack("bk"), stack("bv")], axis=-1)   # (NB, 3D)
    return {
        "wqkv": wqkv.astype(jnp.bfloat16),
        "bqkv": bqkv.reshape(NB, 1, 3 * D),
        "wo": stack("wo").astype(jnp.bfloat16),
        "bo": stack("bo").reshape(NB, 1, D),
        "w1": stack("w1").astype(jnp.bfloat16),
        "b1": stack("b1").reshape(NB, 1, U),
        "w2": stack("w2").astype(jnp.bfloat16),
        "b2": stack("b2").reshape(NB, 1, D),
        "g1": stack("g1").reshape(NB, 1, D), "be1": stack("be1").reshape(NB, 1, D),
        "g2": stack("g2").reshape(NB, 1, D), "be2": stack("be2").reshape(NB, 1, D),
    }


def transformer_text_encoder(ids, ilens, params, num_heads):
    B, L = ids.shape
    D = params["embed_table"].shape[1]
    assert D % num_heads == 0

    # masks = ~make_pad_mask(ilens)[:, None, :]  -> 1.0 = valid frame
    valid = (jnp.arange(L)[None, :] < ilens[:, None]).astype(jnp.float32)     # (B, L)

    # TODO(synk): the nn.Embedding token gather + emb*sqrt(D)+PE stay in JAX glue (tiny;
    # XLA fuses them into the kernel input); everything downstream is one Pallas kernel.
    emb = jnp.take(params["embed_table"], ids, axis=0)                        # (B, L, D)
    x0 = (emb * jnp.float32(math.sqrt(D)) + positional_encoding(L, D)[None]).reshape(B * L, D)

    # leading parallel batch axis: uses both v7x TensorCores; harmless on v5e/v6e.
    batch_chunks = 2 if (B % 2 == 0 and ((B // 2) * L) % 8 == 0) else 1

    stacked = prepare_stacked(params["layers"])
    x = fused_text_encoder(x0, valid[:, None, :], stacked,
                           params["after_g"].reshape(1, D),
                           params["after_b"].reshape(1, D),
                           batch=B, num_heads=num_heads, batch_chunks=batch_chunks)
    xs_pad = x.reshape(B, L, D)
    olens = jnp.sum(valid, axis=-1).astype(jnp.int32)                         # masks.squeeze(1).sum(1)
    return xs_pad, olens, None


# ---------------------------- pure-JAX reference (self-check) ----------------------------

def reference_forward(ids, ilens, params, num_heads):
    B, L = ids.shape
    D = params["embed_table"].shape[1]
    H = num_heads
    dk = D // H
    neg_inf = jnp.float32(jnp.finfo(jnp.float32).min)

    valid = (jnp.arange(L)[None, :] < ilens[:, None]).astype(jnp.float32)
    mask = valid[:, None, None, :] > 0.0                                      # (B, 1, 1, L)

    x = jnp.take(params["embed_table"], ids, axis=0) * math.sqrt(D) + positional_encoding(L, D)
    for lp in params["layers"]:
        res = x
        xn = _layer_norm(x, lp["g1"], lp["be1"])
        q = (xn @ lp["wq"] + lp["bq"]).reshape(B, L, H, dk).transpose(0, 2, 1, 3)
        k = (xn @ lp["wk"] + lp["bk"]).reshape(B, L, H, dk).transpose(0, 2, 1, 3)
        v = (xn @ lp["wv"] + lp["bv"]).reshape(B, L, H, dk).transpose(0, 2, 1, 3)
        scores = jnp.einsum('bhqd,bhkd->bhqk', q, k) / math.sqrt(dk)
        scores = jnp.where(mask, scores, neg_inf)
        attn = jnp.where(mask, jax.nn.softmax(scores, axis=-1), 0.0)
        ctx = jnp.einsum('bhqk,bhkd->bhqd', attn, v).transpose(0, 2, 1, 3).reshape(B, L, D)
        x = res + (ctx @ lp["wo"] + lp["bo"])
        res = x
        xn = _layer_norm(x, lp["g2"], lp["be2"])
        x = res + (jnp.maximum(xn @ lp["w1"] + lp["b1"], 0.0) @ lp["w2"] + lp["b2"])
    x = _layer_norm(x, params["after_g"], params["after_b"])
    olens = jnp.sum(valid, axis=-1).astype(jnp.int32)
    return x, olens


if __name__ == "__main__":
    # small config consistent with the module: input_size(vocab)=50, output_size=32,
    # attention_heads=4, linear_units=64, num_blocks=2; batch=2, seq=8
    VOCAB, D, HEADS, UNITS, BLOCKS = 50, 32, 4, 64, 2
    B, L = 2, 8

    key = jax.random.PRNGKey(0)
    k_ids, k_params = jax.random.split(key)
    ids = jax.random.randint(k_ids, (B, L), 0, VOCAB, dtype=jnp.int32)
    ilens = jnp.array([8, 5], dtype=jnp.int32)
    params = init_params(k_params, VOCAB, D, UNITS, BLOCKS)

    xs_out, olens, _ = transformer_text_encoder(ids, ilens, params, HEADS)
    jax.block_until_ready(xs_out)
    jax.block_until_ready(olens)

    assert xs_out.shape == (B, L, D) and olens.shape == (B,)
    assert bool(jnp.all(jnp.isfinite(xs_out)))

    # numerical self-check against a pure-JAX f32 replica of the PyTorch module.
    # The kernel stores matmul weights / feeds MXU operands in bf16 (per perf review),
    # so expected max abs error is O(1e-2); 1e-1 guards against semantic bugs (O(1) off).
    ref_x, ref_olens = reference_forward(ids, ilens, params, HEADS)
    assert bool(jnp.all(olens == ref_olens))
    max_err = float(jnp.max(jnp.abs(xs_out - ref_x)))
    assert max_err < 1e-1, f"mismatch vs reference: max_err={max_err}"

    print("KERNEL_OK")
</pallas_src>

<mosaic_0001>
module attributes {stable_mosaic.version = 11 : i64} {
  func.func @_fused_encoder_kernel(%arg0: i32, %arg1: i32, %arg2: memref<8x32xf32, #tpu.memory_space<vmem>>, %arg3: memref<1x1x8xf32, #tpu.memory_space<vmem>>, %arg4: memref<1x32x96xbf16, #tpu.memory_space<vmem>>, %arg5: memref<1x1x96xf32, #tpu.memory_space<vmem>>, %arg6: memref<1x32x32xbf16, #tpu.memory_space<vmem>>, %arg7: memref<1x1x32xf32, #tpu.memory_space<vmem>>, %arg8: memref<1x32x64xbf16, #tpu.memory_space<vmem>>, %arg9: memref<1x1x64xf32, #tpu.memory_space<vmem>>, %arg10: memref<1x64x32xbf16, #tpu.memory_space<vmem>>, %arg11: memref<1x1x32xf32, #tpu.memory_space<vmem>>, %arg12: memref<1x1x32xf32, #tpu.memory_space<vmem>>, %arg13: memref<1x1x32xf32, #tpu.memory_space<vmem>>, %arg14: memref<1x1x32xf32, #tpu.memory_space<vmem>>, %arg15: memref<1x1x32xf32, #tpu.memory_space<vmem>>, %arg16: memref<1x32xf32, #tpu.memory_space<vmem>>, %arg17: memref<1x32xf32, #tpu.memory_space<vmem>>, %arg18: memref<8x32xf32, #tpu.memory_space<vmem>>, %arg19: memref<8x96xf32, #tpu.memory_space<vmem>>, %arg20: memref<8x32xf32, #tpu.memory_space<vmem>>) attributes {dimension_semantics = [#tpu.dimension_semantics<parallel>, #tpu.dimension_semantics<arbitrary>], iteration_bounds = array<i64: 2, 2>, scalar_prefetch = 0 : i64, scratch_operands = 2 : i64, tpu.core_type = #tpu.core_type<tc>, window_params = [{transform_indices = @transform_0, window_bounds = array<i64: 8, 32>}, {transform_indices = @transform_1, window_bounds = array<i64: 1, 1, 8>}, {transform_indices = @transform_2, window_bounds = array<i64: 1, 32, 96>}, {transform_indices = @transform_3, window_bounds = array<i64: 1, 1, 96>}, {transform_indices = @transform_4, window_bounds = array<i64: 1, 32, 32>}, {transform_indices = @transform_5, window_bounds = array<i64: 1, 1, 32>}, {transform_indices = @transform_6, window_bounds = array<i64: 1, 32, 64>}, {transform_indices = @transform_7, window_bounds = array<i64: 1, 1, 64>}, {transform_indices = @transform_8, window_bounds = array<i64: 1, 64, 32>}, {transform_indices = @transform_9, window_bounds = array<i64: 1, 1, 32>}, {transform_indices = @transform_10, window_bounds = array<i64: 1, 1, 32>}, {transform_indices = @transform_11, window_bounds = array<i64: 1, 1, 32>}, {transform_indices = @transform_12, window_bounds = array<i64: 1, 1, 32>}, {transform_indices = @transform_13, window_bounds = array<i64: 1, 1, 32>}, {pipeline_mode = #tpu.pipeline_mode<synchronous>, transform_indices = @transform_14, window_bounds = array<i64: 1, 32>}, {pipeline_mode = #tpu.pipeline_mode<synchronous>, transform_indices = @transform_15, window_bounds = array<i64: 1, 32>}, {transform_indices = @transform_16, window_bounds = array<i64: 8, 32>}]} {
    %c0_i32 = arith.constant 0 : i32
    %0 = arith.cmpi eq, %arg1, %c0_i32 : i32
    %1 = arith.extui %0 : i1 to i32
    %c0_i32_0 = arith.constant 0 : i32
    %2 = arith.cmpi ne, %1, %c0_i32_0 : i32
    scf.if %2 {
      %c0_105 = arith.constant 0 : index
      %c0_106 = arith.constant 0 : index
      %225 = vector.load %arg2[%c0_105, %c0_106] : memref<8x32xf32, #tpu.memory_space<vmem>>, vector<8x32xf32>
      %c0_107 = arith.constant 0 : index
      %c0_108 = arith.constant 0 : index
      %226 = vector.load %arg18[%c0_107, %c0_108] : memref<8x32xf32, #tpu.memory_space<vmem>>, vector<8x32xf32>
      tpu.vector_store %arg18[%c0_107, %c0_108], %225 {strides = array<i32>} : memref<8x32xf32, #tpu.memory_space<vmem>>, vector<8x32xf32>,
    } else {
    }
    %c0 = arith.constant 0 : index
    %c0_1 = arith.constant 0 : index
    %3 = vector.load %arg18[%c0, %c0_1] : memref<8x32xf32, #tpu.memory_space<vmem>>, vector<8x32xf32>
    %c0_2 = arith.constant 0 : index
    %c0_3 = arith.constant 0 : index
    %c0_4 = arith.constant 0 : index
    %4 = vector.load %arg3[%c0_2, %c0_3, %c0_4] : memref<1x1x8xf32, #tpu.memory_space<vmem>>, vector<1x1x8xf32>
    %cst = arith.constant 1.000000e+00 : f32
    %5 = vector.broadcast %cst : f32 to vector<1x1x8xf32>
    %6 = arith.subf %4, %5 : vector<1x1x8xf32>
    %cst_5 = arith.constant 1.000000e+30 : f32
    %7 = vector.broadcast %cst_5 : f32 to vector<1x1x8xf32>
    %8 = arith.mulf %6, %7 : vector<1x1x8xf32>
    %c0_6 = arith.constant 0 : index
    %c0_7 = arith.constant 0 : index
    %c0_8 = arith.constant 0 : index
    %9 = vector.load %arg12[%c0_6, %c0_7, %c0_8] : memref<1x1x32xf32, #tpu.memory_space<vmem>>, vector<1x1x32xf32>
    %10 = vector.shape_cast %9 : vector<1x1x32xf32> to vector<1x32xf32>
    %c0_9 = arith.constant 0 : index
    %c0_10 = arith.constant 0 : index
    %c0_11 = arith.constant 0 : index
    %11 = vector.load %arg13[%c0_9, %c0_10, %c0_11] : memref<1x1x32xf32, #tpu.memory_space<vmem>>, vector<1x1x32xf32>
    %12 = vector.shape_cast %11 : vector<1x1x32xf32> to vector<1x32xf32>
    %cst_12 = arith.constant dense<0.000000e+00> : vector<8xf32>
    %13 = vector.multi_reduction <add>, %3, %cst_12 [1] : vector<8x32xf32> to vector<8xf32>
    %14 = vector.shape_cast %13 : vector<8xf32> to vector<8x1xf32>
    %cst_13 = arith.constant 3.200000e+01 : f32
    %15 = vector.broadcast %cst_13 : f32 to vector<8x1xf32>
    %16 = arith.divf %14, %15 : vector<8x1xf32>
    %17 = vector.broadcast %16 : vector<8x1xf32> to vector<8x32xf32>
    %18 = arith.subf %3, %17 : vector<8x32xf32>
    %19 = arith.mulf %18, %18 : vector<8x32xf32>
    %cst_14 = arith.constant dense<0.000000e+00> : vector<8xf32>
    %20 = vector.multi_reduction <add>, %19, %cst_14 [1] : vector<8x32xf32> to vector<8xf32>
    %21 = vector.shape_cast %20 : vector<8xf32> to vector<8x1xf32>
    %cst_15 = arith.constant 3.200000e+01 : f32
    %22 = vector.broadcast %cst_15 : f32 to vector<8x1xf32>
    %23 = arith.divf %21, %22 : vector<8x1xf32>
    %24 = vector.broadcast %16 : vector<8x1xf32> to vector<8x32xf32>
    %25 = arith.subf %3, %24 : vector<8x32xf32>
    %cst_16 = arith.constant 9.99999996E-13 : f32
    %26 = vector.broadcast %cst_16 : f32 to vector<8x1xf32>
    %27 = arith.addf %23, %26 : vector<8x1xf32>
    %28 = math.rsqrt %27 : vector<8x1xf32>
    %29 = vector.broadcast %28 : vector<8x1xf32> to vector<8x32xf32>
    %30 = arith.mulf %25, %29 : vector<8x32xf32>
    %31 = vector.broadcast %10 : vector<1x32xf32> to vector<8x32xf32>
    %32 = arith.mulf %30, %31 : vector<8x32xf32>
    %33 = vector.broadcast %12 : vector<1x32xf32> to vector<8x32xf32>
    %34 = arith.addf %32, %33 : vector<8x32xf32>
    %35 = arith.truncf %34 : vector<8x32xf32> to vector<8x32xbf16>
    %c0_17 = arith.constant 0 : index
    %c0_18 = arith.constant 0 : index
    %c0_19 = arith.constant 0 : index
    %36 = vector.load %arg4[%c0_17, %c0_18, %c0_19] : memref<1x32x96xbf16, #tpu.memory_space<vmem>>, vector<1x32x96xbf16>
    %37 = vector.shape_cast %36 : vector<1x32x96xbf16> to vector<32x96xbf16>
    %cst_20 = arith.constant dense<0.000000e+00> : vector<8x96xf32>
    %38 = tpu.matmul %35, %37, %cst_20 {dimension_numbers = #tpu.dot_dimension_numbers<[1], [0], [0], [1], [0, 0, 1, 1], [], []>} : vector<8x32xbf16>, vector<32x96xbf16>, vector<8x96xf32> -> vector<8x96xf32>
    %c0_21 = arith.constant 0 : index
    %c0_22 = arith.constant 0 : index
    %c0_23 = arith.constant 0 : index
    %39 = vector.load %arg5[%c0_21, %c0_22, %c0_23] : memref<1x1x96xf32, #tpu.memory_space<vmem>>, vector<1x1x96xf32>
    %40 = vector.shape_cast %39 : vector<1x1x96xf32> to vector<1x96xf32>
    %41 = vector.broadcast %40 : vector<1x96xf32> to vector<8x96xf32>
    %42 = arith.addf %38, %41 : vector<8x96xf32>
    %c0_24 = arith.constant 0 : index
    %c0_25 = arith.constant 0 : index
    %43 = vector.load %arg19[%c0_24, %c0_25] : memref<8x96xf32, #tpu.memory_space<vmem>>, vector<8x96xf32>
    tpu.vector_store %arg19[%c0_24, %c0_25], %42 {strides = array<i32>} : memref<8x96xf32, #tpu.memory_space<vmem>>, vector<8x96xf32>,
    %c0_26 = arith.constant 0 : index
    %c0_27 = arith.constant 0 : index
    %44 = vector.load %arg19[%c0_26, %c0_27] : memref<8x96xf32, #tpu.memory_space<vmem>>, vector<8x8xf32>
    %cst_28 = arith.constant 0.353553385 : f32
    %45 = vector.broadcast %cst_28 : f32 to vector<8x8xf32>
    %46 = arith.mulf %44, %45 : vector<8x8xf32>
    %47 = vector.shape_cast %46 : vector<8x8xf32> to vector<1x8x8xf32>
    %c0_29 = arith.constant 0 : index
    %c32 = arith.constant 32 : index
    %48 = vector.load %arg19[%c0_29, %c32] : memref<8x96xf32, #tpu.memory_space<vmem>>, vector<8x8xf32>
    %49 = vector.shape_cast %48 : vector<8x8xf32> to vector<1x8x8xf32>
    %c0_30 = arith.constant 0 : index
    %c64 = arith.constant 64 : index
    %50 = vector.load %arg19[%c0_30, %c64] : memref<8x96xf32, #tpu.memory_space<vmem>>, vector<8x8xf32>
    %51 = vector.shape_cast %50 : vector<8x8xf32> to vector<1x8x8xf32>
    %52 = arith.truncf %47 : vector<1x8x8xf32> to vector<1x8x8xbf16>
    %53 = arith.truncf %49 : vector<1x8x8xf32> to vector<1x8x8xbf16>
    "tpu.trace_start"() <{level = 10 : i32, message = "bqd,bkd->bqk"}> : () -> ()
    %cst_31 = arith.constant dense<0.000000e+00> : vector<1x8x8xf32>
    %54 = tpu.matmul %52, %53, %cst_31 {dimension_numbers = #tpu.dot_dimension_numbers<[2], [2], [1], [1], [0, 0, 0, 1, 1, 1], [0], [0]>} : vector<1x8x8xbf16>, vector<1x8x8xbf16>, vector<1x8x8xf32> -> vector<1x8x8xf32>
    "tpu.trace_stop"() : () -> ()
    %55 = vector.broadcast %8 : vector<1x1x8xf32> to vector<1x8x8xf32>
    %56 = arith.addf %54, %55 : vector<1x8x8xf32>
    %cst_32 = arith.constant dense<0xFF800000> : vector<1x8xf32>
    %57 = vector.multi_reduction <maximumf>, %56, %cst_32 [2] : vector<1x8x8xf32> to vector<1x8xf32>
    %58 = vector.shape_cast %57 : vector<1x8xf32> to vector<1x8x1xf32>
    %59 = vector.broadcast %58 : vector<1x8x1xf32> to vector<1x8x8xf32>
    %60 = arith.subf %56, %59 : vector<1x8x8xf32>
    %61 = math.exp %60 : vector<1x8x8xf32>
    %cst_33 = arith.constant dense<0.000000e+00> : vector<1x8xf32>
    %62 = vector.multi_reduction <add>, %61, %cst_33 [2] : vector<1x8x8xf32> to vector<1x8xf32>
    %63 = vector.shape_cast %62 : vector<1x8xf32> to vector<1x8x1xf32>
    %64 = tpu.reciprocal %63 {approx = true} : vector<1x8x1xf32> -> vector<1x8x1xf32>
    %65 = vector.broadcast %64 : vector<1x8x1xf32> to vector<1x8x8xf32>
    %66 = arith.mulf %61, %65 : vector<1x8x8xf32>
    %67 = vector.broadcast %4 : vector<1x1x8xf32> to vector<1x8x8xf32>
    %68 = arith.mulf %66, %67 : vector<1x8x8xf32>
    %69 = arith.truncf %68 : vector<1x8x8xf32> to vector<1x8x8xbf16>
    %70 = arith.truncf %51 : vector<1x8x8xf32> to vector<1x8x8xbf16>
    "tpu.trace_start"() <{level = 10 : i32, message = "bqk,bkd->bqd"}> : () -> ()
    %cst_34 = arith.constant dense<0.000000e+00> : vector<1x8x8xf32>
    %71 = tpu.matmul %69, %70, %cst_34 {dimension_numbers = #tpu.dot_dimension_numbers<[2], [1], [1], [2], [0, 0, 0, 1, 1, 2], [0], [0]>} : vector<1x8x8xbf16>, vector<1x8x8xbf16>, vector<1x8x8xf32> -> vector<1x8x8xf32>
    "tpu.trace_stop"() : () -> ()
    %72 = vector.shape_cast %71 : vector<1x8x8xf32> to vector<8x8xf32>
    %c0_35 = arith.constant 0 : index
    %c0_36 = arith.constant 0 : index
    %73 = vector.load %arg20[%c0_35, %c0_36] : memref<8x32xf32, #tpu.memory_space<vmem>>, vector<8x8xf32>
    tpu.vector_store %arg20[%c0_35, %c0_36], %72 {strides = array<i32>} : memref<8x32xf32, #tpu.memory_space<vmem>>, vector<8x8xf32>,
    %c0_37 = arith.constant 0 : index
    %c8 = arith.constant 8 : index
    %74 = vector.load %arg19[%c0_37, %c8] : memref<8x96xf32, #tpu.memory_space<vmem>>, vector<8x8xf32>
    %cst_38 = arith.constant 0.353553385 : f32
    %75 = vector.broadcast %cst_38 : f32 to vector<8x8xf32>
    %76 = arith.mulf %74, %75 : vector<8x8xf32>
    %77 = vector.shape_cast %76 : vector<8x8xf32> to vector<1x8x8xf32>
    %c0_39 = arith.constant 0 : index
    %c40 = arith.constant 40 : index
    %78 = vector.load %arg19[%c0_39, %c40] : memref<8x96xf32, #tpu.memory_space<vmem>>, vector<8x8xf32>
    %79 = vector.shape_cast %78 : vector<8x8xf32> to vector<1x8x8xf32>
    %c0_40 = arith.constant 0 : index
    %c72 = arith.constant 72 : index
    %80 = vector.load %arg19[%c0_40, %c72] : memref<8x96xf32, #tpu.memory_space<vmem>>, vector<8x8xf32>
    %81 = vector.shape_cast %80 : vector<8x8xf32> to vector<1x8x8xf32>
    %82 = arith.truncf %77 : vector<1x8x8xf32> to vector<1x8x8xbf16>
    %83 = arith.truncf %79 : vector<1x8x8xf32> to vector<1x8x8xbf16>
    "tpu.trace_start"() <{level = 10 : i32, message = "bqd,bkd->bqk"}> : () -> ()
    %cst_41 = arith.constant dense<0.000000e+00> : vector<1x8x8xf32>
    %84 = tpu.matmul %82, %83, %cst_41 {dimension_numbers = #tpu.dot_dimension_numbers<[2], [2], [1], [1], [0, 0, 0, 1, 1, 1], [0], [0]>} : vector<1x8x8xbf16>, vector<1x8x8xbf16>, vector<1x8x8xf32> -> vector<1x8x8xf32>
    "tpu.trace_stop"() : () -> ()
    %85 = vector.broadcast %8 : vector<1x1x8xf32> to vector<1x8x8xf32>
    %86 = arith.addf %84, %85 : vector<1x8x8xf32>
    %cst_42 = arith.constant dense<0xFF800000> : vector<1x8xf32>
    %87 = vector.multi_reduction <maximumf>, %86, %cst_42 [2] : vector<1x8x8xf32> to vector<1x8xf32>
    %88 = vector.shape_cast %87 : vector<1x8xf32> to vector<1x8x1xf32>
    %89 = vector.broadcast %88 : vector<1x8x1xf32> to vector<1x8x8xf32>
    %90 = arith.subf %86, %89 : vector<1x8x8xf32>
    %91 = math.exp %90 : vector<1x8x8xf32>
    %cst_43 = arith.constant dense<0.000000e+00> : vector<1x8xf32>
    %92 = vector.multi_reduction <add>, %91, %cst_43 [2] : vector<1x8x8xf32> to vector<1x8xf32>
    %93 = vector.shape_cast %92 : vector<1x8xf32> to vector<1x8x1xf32>
    %94 = tpu.reciprocal %93 {approx = true} : vector<1x8x1xf32> -> vector<1x8x1xf32>
    %95 = vector.broadcast %94 : vector<1x8x1xf32> to vector<1x8x8xf32>
    %96 = arith.mulf %91, %95 : vector<1x8x8xf32>
    %97 = vector.broadcast %4 : vector<1x1x8xf32> to vector<1x8x8xf32>
    %98 = arith.mulf %96, %97 : vector<1x8x8xf32>
    %99 = arith.truncf %98 : vector<1x8x8xf32> to vector<1x8x8xbf16>
    %100 = arith.truncf %81 : vector<1x8x8xf32> to vector<1x8x8xbf16>
    "tpu.trace_start"() <{level = 10 : i32, message = "bqk,bkd->bqd"}> : () -> ()
    %cst_44 = arith.constant dense<0.000000e+00> : vector<1x8x8xf32>
    %101 = tpu.matmul %99, %100, %cst_44 {dimension_numbers = #tpu.dot_dimension_numbers<[2], [1], [1], [2], [0, 0, 0, 1, 1, 2], [0], [0]>} : vector<1x8x8xbf16>, vector<1x8x8xbf16>, vector<1x8x8xf32> -> vector<1x8x8xf32>
    "tpu.trace_stop"() : () -> ()
    %102 = vector.shape_cast %101 : vector<1x8x8xf32> to vector<8x8xf32>
    %c0_45 = arith.constant 0 : index
    %c8_46 = arith.constant 8 : index
    %103 = vector.load %arg20[%c0_45, %c8_46] : memref<8x32xf32, #tpu.memory_space<vmem>>, vector<8x8xf32>
    tpu.vector_store %arg20[%c0_45, %c8_46], %102 {strides = array<i32>} : memref<8x32xf32, #tpu.memory_space<vmem>>, vector<8x8xf32>,
    %c0_47 = arith.constant 0 : index
    %c16 = arith.constant 16 : index
    %104 = vector.load %arg19[%c0_47, %c16] : memref<8x96xf32, #tpu.memory_space<vmem>>, vector<8x8xf32>
    %cst_48 = arith.constant 0.353553385 : f32
    %105 = vector.broadcast %cst_48 : f32 to vector<8x8xf32>
    %106 = arith.mulf %104, %105 : vector<8x8xf32>
    %107 = vector.shape_cast %106 : vector<8x8xf32> to vector<1x8x8xf32>
    %c0_49 = arith.constant 0 : index
    %c48 = arith.constant 48 : index
    %108 = vector.load %arg19[%c0_49, %c48] : memref<8x96xf32, #tpu.memory_space<vmem>>, vector<8x8xf32>
    %109 = vector.shape_cast %108 : vector<8x8xf32> to vector<1x8x8xf32>
    %c0_50 = arith.constant 0 : index
    %c80 = arith.constant 80 : index
    %110 = vector.load %arg19[%c0_50, %c80] : memref<8x96xf32, #tpu.memory_space<vmem>>, vector<8x8xf32>
    %111 = vector.shape_cast %110 : vector<8x8xf32> to vector<1x8x8xf32>
    %112 = arith.truncf %107 : vector<1x8x8xf32> to vector<1x8x8xbf16>
    %113 = arith.truncf %109 : vector<1x8x8xf32> to vector<1x8x8xbf16>
    "tpu.trace_start"() <{level = 10 : i32, message = "bqd,bkd->bqk"}> : () -> ()
    %cst_51 = arith.constant dense<0.000000e+00> : vector<1x8x8xf32>
    %114 = tpu.matmul %112, %113, %cst_51 {dimension_numbers = #tpu.dot_dimension_numbers<[2], [2], [1], [1], [0, 0, 0, 1, 1, 1], [0], [0]>} : vector<1x8x8xbf16>, vector<1x8x8xbf16>, vector<1x8x8xf32> -> vector<1x8x8xf32>
    "tpu.trace_stop"() : () -> ()
    %115 = vector.broadcast %8 : vector<1x1x8xf32> to vector<1x8x8xf32>
    %116 = arith.addf %114, %115 : vector<1x8x8xf32>
    %cst_52 = arith.constant dense<0xFF800000> : vector<1x8xf32>
    %117 = vector.multi_reduction <maximumf>, %116, %cst_52 [2] : vector<1x8x8xf32> to vector<1x8xf32>
    %118 = vector.shape_cast %117 : vector<1x8xf32> to vector<1x8x1xf32>
    %119 = vector.broadcast %118 : vector<1x8x1xf32> to vector<1x8x8xf32>
    %120 = arith.subf %116, %119 : vector<1x8x8xf32>
    %121 = math.exp %120 : vector<1x8x8xf32>
    %cst_53 = arith.constant dense<0.000000e+00> : vector<1x8xf32>
    %122 = vector.multi_reduction <add>, %121, %cst_53 [2] : vector<1x8x8xf32> to vector<1x8xf32>
    %123 = vector.shape_cast %122 : vector<1x8xf32> to vector<1x8x1xf32>
    %124 = tpu.reciprocal %123 {approx = true} : vector<1x8x1xf32> -> vector<1x8x1xf32>
    %125 = vector.broadcast %124 : vector<1x8x1xf32> to vector<1x8x8xf32>
    %126 = arith.mulf %121, %125 : vector<1x8x8xf32>
    %127 = vector.broadcast %4 : vector<1x1x8xf32> to vector<1x8x8xf32>
    %128 = arith.mulf %126, %127 : vector<1x8x8xf32>
    %129 = arith.truncf %128 : vector<1x8x8xf32> to vector<1x8x8xbf16>
    %130 = arith.truncf %111 : vector<1x8x8xf32> to vector<1x8x8xbf16>
    "tpu.trace_start"() <{level = 10 : i32, message = "bqk,bkd->bqd"}> : () -> ()
    %cst_54 = arith.constant dense<0.000000e+00> : vector<1x8x8xf32>
    %131 = tpu.matmul %129, %130, %cst_54 {dimension_numbers = #tpu.dot_dimension_numbers<[2], [1], [1], [2], [0, 0, 0, 1, 1, 2], [0], [0]>} : vector<1x8x8xbf16>, vector<1x8x8xbf16>, vector<1x8x8xf32> -> vector<1x8x8xf32>
    "tpu.trace_stop"() : () -> ()
    %132 = vector.shape_cast %131 : vector<1x8x8xf32> to vector<8x8xf32>
    %c0_55 = arith.constant 0 : index
    %c16_56 = arith.constant 16 : index
    %133 = vector.load %arg20[%c0_55, %c16_56] : memref<8x32xf32, #tpu.memory_space<vmem>>, vector<8x8xf32>
    tpu.vector_store %arg20[%c0_55, %c16_56], %132 {strides = array<i32>} : memref<8x32xf32, #tpu.memory_space<vmem>>, vector<8x8xf32>,
    %c0_57 = arith.constant 0 : index
    %c24 = arith.constant 24 : index
    %134 = vector.load %arg19[%c0_57, %c24] : memref<8x96xf32, #tpu.memory_space<vmem>>, vector<8x8xf32>
    %cst_58 = arith.constant 0.353553385 : f32
    %135 = vector.broadcast %cst_58 : f32 to vector<8x8xf32>
    %136 = arith.mulf %134, %135 : vector<8x8xf32>
    %137 = vector.shape_cast %136 : vector<8x8xf32> to vector<1x8x8xf32>
    %c0_59 = arith.constant 0 : index
    %c56 = arith.constant 56 : index
    %138 = vector.load %arg19[%c0_59, %c56] : memref<8x96xf32, #tpu.memory_space<vmem>>, vector<8x8xf32>
    %139 = vector.shape_cast %138 : vector<8x8xf32> to vector<1x8x8xf32>
    %c0_60 = arith.constant 0 : index
    %c88 = arith.constant 88 : index
    %140 = vector.load %arg19[%c0_60, %c88] : memref<8x96xf32, #tpu.memory_space<vmem>>, vector<8x8xf32>
    %141 = vector.shape_cast %140 : vector<8x8xf32> to vector<1x8x8xf32>
    %142 = arith.truncf %137 : vector<1x8x8xf32> to vector<1x8x8xbf16>
    %143 = arith.truncf %139 : vector<1x8x8xf32> to vector<1x8x8xbf16>
    "tpu.trace_start"() <{level = 10 : i32, message = "bqd,bkd->bqk"}> : () -> ()
    %cst_61 = arith.constant dense<0.000000e+00> : vector<1x8x8xf32>
    %144 = tpu.matmul %142, %143, %cst_61 {dimension_numbers = #tpu.dot_dimension_numbers<[2], [2], [1], [1], [0, 0, 0, 1, 1, 1], [0], [0]>} : vector<1x8x8xbf16>, vector<1x8x8xbf16>, vector<1x8x8xf32> -> vector<1x8x8xf32>
    "tpu.trace_stop"() : () -> ()
    %145 = vector.broadcast %8 : vector<1x1x8xf32> to vector<1x8x8xf32>
    %146 = arith.addf %144, %145 : vector<1x8x8xf32>
    %cst_62 = arith.constant dense<0xFF800000> : vector<1x8xf32>
    %147 = vector.multi_reduction <maximumf>, %146, %cst_62 [2] : vector<1x8x8xf32> to vector<1x8xf32>
    %148 = vector.shape_cast %147 : vector<1x8xf32> to vector<1x8x1xf32>
    %149 = vector.broadcast %148 : vector<1x8x1xf32> to vector<1x8x8xf32>
    %150 = arith.subf %146, %149 : vector<1x8x8xf32>
    %151 = math.exp %150 : vector<1x8x8xf32>
    %cst_63 = arith.constant dense<0.000000e+00> : vector<1x8xf32>
    %152 = vector.multi_reduction <add>, %151, %cst_63 [2] : vector<1x8x8xf32> to vector<1x8xf32>
    %153 = vector.shape_cast %152 : vector<1x8xf32> to vector<1x8x1xf32>
    %154 = tpu.reciprocal %153 {approx = true} : vector<1x8x1xf32> -> vector<1x8x1xf32>
    %155 = vector.broadcast %154 : vector<1x8x1xf32> to vector<1x8x8xf32>
    %156 = arith.mulf %151, %155 : vector<1x8x8xf32>
    %157 = vector.broadcast %4 : vector<1x1x8xf32> to vector<1x8x8xf32>
    %158 = arith.mulf %156, %157 : vector<1x8x8xf32>
    %159 = arith.truncf %158 : vector<1x8x8xf32> to vector<1x8x8xbf16>
    %160 = arith.truncf %141 : vector<1x8x8xf32> to vector<1x8x8xbf16>
    "tpu.trace_start"() <{level = 10 : i32, message = "bqk,bkd->bqd"}> : () -> ()
    %cst_64 = arith.constant dense<0.000000e+00> : vector<1x8x8xf32>
    %161 = tpu.matmul %159, %160, %cst_64 {dimension_numbers = #tpu.dot_dimension_numbers<[2], [1], [1], [2], [0, 0, 0, 1, 1, 2], [0], [0]>} : vector<1x8x8xbf16>, vector<1x8x8xbf16>, vector<1x8x8xf32> -> vector<1x8x8xf32>
    "tpu.trace_stop"() : () -> ()
    %162 = vector.shape_cast %161 : vector<1x8x8xf32> to vector<8x8xf32>
    %c0_65 = arith.constant 0 : index
    %c24_66 = arith.constant 24 : index
    %163 = vector.load %arg20[%c0_65, %c24_66] : memref<8x32xf32, #tpu.memory_space<vmem>>, vector<8x8xf32>
    tpu.vector_store %arg20[%c0_65, %c24_66], %162 {strides = array<i32>} : memref<8x32xf32, #tpu.memory_space<vmem>>, vector<8x8xf32>,
    %c0_67 = arith.constant 0 : index
    %c0_68 = arith.constant 0 : index
    %164 = vector.load %arg20[%c0_67, %c0_68] : memref<8x32xf32, #tpu.memory_space<vmem>>, vector<8x32xf32>
    %165 = arith.truncf %164 : vector<8x32xf32> to vector<8x32xbf16>
    %c0_69 = arith.constant 0 : index
    %c0_70 = arith.constant 0 : index
    %c0_71 = arith.constant 0 : index
    %166 = vector.load %arg6[%c0_69, %c0_70, %c0_71] : memref<1x32x32xbf16, #tpu.memory_space<vmem>>, vector<1x32x32xbf16>
    %167 = vector.shape_cast %166 : vector<1x32x32xbf16> to vector<32x32xbf16>
    %cst_72 = arith.constant dense<0.000000e+00> : vector<8x32xf32>
    %168 = tpu.matmul %165, %167, %cst_72 {dimension_numbers = #tpu.dot_dimension_numbers<[1], [0], [0], [1], [0, 0, 1, 1], [], []>} : vector<8x32xbf16>, vector<32x32xbf16>, vector<8x32xf32> -> vector<8x32xf32>
    %c0_73 = arith.constant 0 : index
    %c0_74 = arith.constant 0 : index
    %c0_75 = arith.constant 0 : index
    %169 = vector.load %arg7[%c0_73, %c0_74, %c0_75] : memref<1x1x32xf32, #tpu.memory_space<vmem>>, vector<1x1x32xf32>
    %170 = vector.shape_cast %169 : vector<1x1x32xf32> to vector<1x32xf32>
    %171 = vector.broadcast %170 : vector<1x32xf32> to vector<8x32xf32>
    %172 = arith.addf %168, %171 : vector<8x32xf32>
    %173 = arith.addf %3, %172 : vector<8x32xf32>
    %c0_76 = arith.constant 0 : index
    %c0_77 = arith.constant 0 : index
    %c0_78 = arith.constant 0 : index
    %174 = vector.load %arg14[%c0_76, %c0_77, %c0_78] : memref<1x1x32xf32, #tpu.memory_space<vmem>>, vector<1x1x32xf32>
    %175 = vector.shape_cast %174 : vector<1x1x32xf32> to vector<1x32xf32>
    %c0_79 = arith.constant 0 : index
    %c0_80 = arith.constant 0 : index
    %c0_81 = arith.constant 0 : index
    %176 = vector.load %arg15[%c0_79, %c0_80, %c0_81] : memref<1x1x32xf32, #tpu.memory_space<vmem>>, vector<1x1x32xf32>
    %177 = vector.shape_cast %176 : vector<1x1x32xf32> to vector<1x32xf32>
    %cst_82 = arith.constant dense<0.000000e+00> : vector<8xf32>
    %178 = vector.multi_reduction <add>, %173, %cst_82 [1] : vector<8x32xf32> to vector<8xf32>
    %179 = vector.shape_cast %178 : vector<8xf32> to vector<8x1xf32>
    %cst_83 = arith.constant 3.200000e+01 : f32
    %180 = vector.broadcast %cst_83 : f32 to vector<8x1xf32>
    %181 = arith.divf %179, %180 : vector<8x1xf32>
    %182 = vector.broadcast %181 : vector<8x1xf32> to vector<8x32xf32>
    %183 = arith.subf %173, %182 : vector<8x32xf32>
    %184 = arith.mulf %183, %183 : vector<8x32xf32>
    %cst_84 = arith.constant dense<0.000000e+00> : vector<8xf32>
    %185 = vector.multi_reduction <add>, %184, %cst_84 [1] : vector<8x32xf32> to vector<8xf32>
    %186 = vector.shape_cast %185 : vector<8xf32> to vector<8x1xf32>
    %cst_85 = arith.constant 3.200000e+01 : f32
    %187 = vector.broadcast %cst_85 : f32 to vector<8x1xf32>
    %188 = arith.divf %186, %187 : vector<8x1xf32>
    %189 = vector.broadcast %181 : vector<8x1xf32> to vector<8x32xf32>
    %190 = arith.subf %173, %189 : vector<8x32xf32>
    %cst_86 = arith.constant 9.99999996E-13 : f32
    %191 = vector.broadcast %cst_86 : f32 to vector<8x1xf32>
    %192 = arith.addf %188, %191 : vector<8x1xf32>
    %193 = math.rsqrt %192 : vector<8x1xf32>
    %194 = vector.broadcast %193 : vector<8x1xf32> to vector<8x32xf32>
    %195 = arith.mulf %190, %194 : vector<8x32xf32>
    %196 = vector.broadcast %175 : vector<1x32xf32> to vector<8x32xf32>
    %197 = arith.mulf %195, %196 : vector<8x32xf32>
    %198 = vector.broadcast %177 : vector<1x32xf32> to vector<8x32xf32>
    %199 = arith.addf %197, %198 : vector<8x32xf32>
    %200 = arith.truncf %199 : vector<8x32xf32> to vector<8x32xbf16>
    %c0_87 = arith.constant 0 : index
    %c0_88 = arith.constant 0 : index
    %c0_89 = arith.constant 0 : index
    %201 = vector.load %arg8[%c0_87, %c0_88, %c0_89] : memref<1x32x64xbf16, #tpu.memory_space<vmem>>, vector<1x32x64xbf16>
    %202 = vector.shape_cast %201 : vector<1x32x64xbf16> to vector<32x64xbf16>
    %cst_90 = arith.constant dense<0.000000e+00> : vector<8x64xf32>
    %203 = tpu.matmul %200, %202, %cst_90 {dimension_numbers = #tpu.dot_dimension_numbers<[1], [0], [0], [1], [0, 0, 1, 1], [], []>} : vector<8x32xbf16>, vector<32x64xbf16>, vector<8x64xf32> -> vector<8x64xf32>
    %c0_91 = arith.constant 0 : index
    %c0_92 = arith.constant 0 : index
    %c0_93 = arith.constant 0 : index
    %204 = vector.load %arg9[%c0_91, %c0_92, %c0_93] : memref<1x1x64xf32, #tpu.memory_space<vmem>>, vector<1x1x64xf32>
    %205 = vector.shape_cast %204 : vector<1x1x64xf32> to vector<1x64xf32>
    %206 = vector.broadcast %205 : vector<1x64xf32> to vector<8x64xf32>
    %207 = arith.addf %203, %206 : vector<8x64xf32>
    %cst_94 = arith.constant 0.000000e+00 : f32
    %208 = vector.broadcast %cst_94 : f32 to vector<8x64xf32>
    %209 = arith.maximumf %207, %208 : vector<8x64xf32>
    %210 = arith.truncf %209 : vector<8x64xf32> to vector<8x64xbf16>
    %c0_95 = arith.constant 0 : index
    %c0_96 = arith.constant 0 : index
    %c0_97 = arith.constant 0 : index
    %211 = vector.load %arg10[%c0_95, %c0_96, %c0_97] : memref<1x64x32xbf16, #tpu.memory_space<vmem>>, vector<1x64x32xbf16>
    %212 = vector.shape_cast %211 : vector<1x64x32xbf16> to vector<64x32xbf16>
    %cst_98 = arith.constant dense<0.000000e+00> : vector<8x32xf32>
    %213 = tpu.matmul %210, %212, %cst_98 {dimension_numbers = #tpu.dot_dimension_numbers<[1], [0], [0], [1], [0, 0, 1, 1], [], []>} : vector<8x64xbf16>, vector<64x32xbf16>, vector<8x32xf32> -> vector<8x32xf32>
    %c0_99 = arith.constant 0 : index
    %c0_100 = arith.constant 0 : index
    %c0_101 = arith.constant 0 : index
    %214 = vector.load %arg11[%c0_99, %c0_100, %c0_101] : memref<1x1x32xf32, #tpu.memory_space<vmem>>, vector<1x1x32xf32>
    %215 = vector.shape_cast %214 : vector<1x1x32xf32> to vector<1x32xf32>
    %216 = vector.broadcast %215 : vector<1x32xf32> to vector<8x32xf32>
    %217 = arith.addf %213, %216 : vector<8x32xf32>
    %218 = arith.addf %173, %217 : vector<8x32xf32>
    %c1_i32 = arith.constant 1 : i32
    %219 = arith.cmpi ne, %arg1, %c1_i32 : i32
    %220 = arith.extui %219 : i1 to i32
    %c0_i32_102 = arith.constant 0 : i32
    %221 = arith.cmpi ne, %220, %c0_i32_102 : i32
    scf.if %221 {
      %c0_105 = arith.constant 0 : index
      %c0_106 = arith.constant 0 : index
      %225 = vector.load %arg18[%c0_105, %c0_106] : memref<8x32xf32, #tpu.memory_space<vmem>>, vector<8x32xf32>
      tpu.vector_store %arg18[%c0_105, %c0_106], %218 {strides = array<i32>} : memref<8x32xf32, #tpu.memory_space<vmem>>, vector<8x32xf32>,
    } else {
    }
    %c1_i32_103 = arith.constant 1 : i32
    %222 = arith.cmpi eq, %arg1, %c1_i32_103 : i32
    %223 = arith.extui %222 : i1 to i32
    %c0_i32_104 = arith.constant 0 : i32
    %224 = arith.cmpi ne, %223, %c0_i32_104 : i32
    scf.if %224 {
      %c0_105 = arith.constant 0 : index
      %c0_106 = arith.constant 0 : index
      %225 = vector.load %arg16[%c0_105, %c0_106] : memref<1x32xf32, #tpu.memory_space<vmem>>, vector<1x32xf32>
      %c0_107 = arith.constant 0 : index
      %c0_108 = arith.constant 0 : index
      %226 = vector.load %arg17[%c0_107, %c0_108] : memref<1x32xf32, #tpu.memory_space<vmem>>, vector<1x32xf32>
      %cst_109 = arith.constant dense<0.000000e+00> : vector<8xf32>
      %227 = vector.multi_reduction <add>, %218, %cst_109 [1] : vector<8x32xf32> to vector<8xf32>
      %228 = vector.shape_cast %227 : vector<8xf32> to vector<8x1xf32>
      %cst_110 = arith.constant 3.200000e+01 : f32
      %229 = vector.broadcast %cst_110 : f32 to vector<8x1xf32>
      %230 = arith.divf %228, %229 : vector<8x1xf32>
      %231 = vector.broadcast %230 : vector<8x1xf32> to vector<8x32xf32>
      %232 = arith.subf %218, %231 : vector<8x32xf32>
      %233 = arith.mulf %232, %232 : vector<8x32xf32>
      %cst_111 = arith.constant dense<0.000000e+00> : vector<8xf32>
      %234 = vector.multi_reduction <add>, %233, %cst_111 [1] : vector<8x32xf32> to vector<8xf32>
      %235 = vector.shape_cast %234 : vector<8xf32> to vector<8x1xf32>
      %cst_112 = arith.constant 3.200000e+01 : f32
      %236 = vector.broadcast %cst_112 : f32 to vector<8x1xf32>
      %237 = arith.divf %235, %236 : vector<8x1xf32>
      %238 = vector.broadcast %230 : vector<8x1xf32> to vector<8x32xf32>
      %239 = arith.subf %218, %238 : vector<8x32xf32>
      %cst_113 = arith.constant 9.99999996E-13 : f32
      %240 = vector.broadcast %cst_113 : f32 to vector<8x1xf32>
      %241 = arith.addf %237, %240 : vector<8x1xf32>
      %242 = math.rsqrt %241 : vector<8x1xf32>
      %243 = vector.broadcast %242 : vector<8x1xf32> to vector<8x32xf32>
      %244 = arith.mulf %239, %243 : vector<8x32xf32>
      %245 = vector.broadcast %225 : vector<1x32xf32> to vector<8x32xf32>
      %246 = arith.mulf %244, %245 : vector<8x32xf32>
      %247 = vector.broadcast %226 : vector<1x32xf32> to vector<8x32xf32>
      %248 = arith.addf %246, %247 : vector<8x32xf32>
      %c0_114 = arith.constant 0 : index
      %c0_115 = arith.constant 0 : index
      %249 = vector.load %arg18[%c0_114, %c0_115] : memref<8x32xf32, #tpu.memory_space<vmem>>, vector<8x32xf32>
      tpu.vector_store %arg18[%c0_114, %c0_115], %248 {strides = array<i32>} : memref<8x32xf32, #tpu.memory_space<vmem>>, vector<8x32xf32>,
    } else {
    }
    return
  }
  func.func @transform_0(%arg0: i32, %arg1: i32) -> (i32, i32) {
    %c0_i32 = arith.constant 0 : i32
    %c0_i32_0 = arith.constant 0 : i32
    return %arg0, %c0_i32 : i32, i32
  }
  func.func @transform_1(%arg0: i32, %arg1: i32) -> (i32, i32, i32) {
    %c0_i32 = arith.constant 0 : i32
    %c0_i32_0 = arith.constant 0 : i32
    %c0_i32_1 = arith.constant 0 : i32
    return %arg0, %c0_i32, %c0_i32_0 : i32, i32, i32
  }
  func.func @transform_2(%arg0: i32, %arg1: i32) -> (i32, i32, i32) {
    %c0_i32 = arith.constant 0 : i32
    %c0_i32_0 = arith.constant 0 : i32
    %c0_i32_1 = arith.constant 0 : i32
    return %arg1, %c0_i32, %c0_i32_0 : i32, i32, i32
  }
  func.func @transform_3(%arg0: i32, %arg1: i32) -> (i32, i32, i32) {
    %c0_i32 = arith.constant 0 : i32
    %c0_i32_0 = arith.constant 0 : i32
    %c0_i32_1 = arith.constant 0 : i32
    return %arg1, %c0_i32, %c0_i32_0 : i32, i32, i32
  }
  func.func @transform_4(%arg0: i32, %arg1: i32) -> (i32, i32, i32) {
    %c0_i32 = arith.constant 0 : i32
    %c0_i32_0 = arith.constant 0 : i32
    %c0_i32_1 = arith.constant 0 : i32
    return %arg1, %c0_i32, %c0_i32_0 : i32, i32, i32
  }
  func.func @transform_5(%arg0: i32, %arg1: i32) -> (i32, i32, i32) {
    %c0_i32 = arith.constant 0 : i32
    %c0_i32_0 = arith.constant 0 : i32
    %c0_i32_1 = arith.constant 0 : i32
    return %arg1, %c0_i32, %c0_i32_0 : i32, i32, i32
  }
  func.func @transform_6(%arg0: i32, %arg1: i32) -> (i32, i32, i32) {
    %c0_i32 = arith.constant 0 : i32
    %c0_i32_0 = arith.constant 0 : i32
    %c0_i32_1 = arith.constant 0 : i32
    return %arg1, %c0_i32, %c0_i32_0 : i32, i32, i32
  }
  func.func @transform_7(%arg0: i32, %arg1: i32) -> (i32, i32, i32) {
    %c0_i32 = arith.constant 0 : i32
    %c0_i32_0 = arith.constant 0 : i32
    %c0_i32_1 = arith.constant 0 : i32
    return %arg1, %c0_i32, %c0_i32_0 : i32, i32, i32
  }
  func.func @transform_8(%arg0: i32, %arg1: i32) -> (i32, i32, i32) {
    %c0_i32 = arith.constant 0 : i32
    %c0_i32_0 = arith.constant 0 : i32
    %c0_i32_1 = arith.constant 0 : i32
    return %arg1, %c0_i32, %c0_i32_0 : i32, i32, i32
  }
  func.func @transform_9(%arg0: i32, %arg1: i32) -> (i32, i32, i32) {
    %c0_i32 = arith.constant 0 : i32
    %c0_i32_0 = arith.constant 0 : i32
    %c0_i32_1 = arith.constant 0 : i32
    return %arg1, %c0_i32, %c0_i32_0 : i32, i32, i32
  }
  func.func @transform_10(%arg0: i32, %arg1: i32) -> (i32, i32, i32) {
    %c0_i32 = arith.constant 0 : i32
    %c0_i32_0 = arith.constant 0 : i32
    %c0_i32_1 = arith.constant 0 : i32
    return %arg1, %c0_i32, %c0_i32_0 : i32, i32, i32
  }
  func.func @transform_11(%arg0: i32, %arg1: i32) -> (i32, i32, i32) {
    %c0_i32 = arith.constant 0 : i32
    %c0_i32_0 = arith.constant 0 : i32
    %c0_i32_1 = arith.constant 0 : i32
    return %arg1, %c0_i32, %c0_i32_0 : i32, i32, i32
  }
  func.func @transform_12(%arg0: i32, %arg1: i32) -> (i32, i32, i32) {
    %c0_i32 = arith.constant 0 : i32
    %c0_i32_0 = arith.constant 0 : i32
    %c0_i32_1 = arith.constant 0 : i32
    return %arg1, %c0_i32, %c0_i32_0 : i32, i32, i32
  }
  func.func @transform_13(%arg0: i32, %arg1: i32) -> (i32, i32, i32) {
    %c0_i32 = arith.constant 0 : i32
    %c0_i32_0 = arith.constant 0 : i32
    %c0_i32_1 = arith.constant 0 : i32
    return %arg1, %c0_i32, %c0_i32_0 : i32, i32, i32
  }
  func.func @transform_14(%arg0: i32, %arg1: i32) -> (i32, i32) {
    %c0_i32 = arith.constant 0 : i32
    %c0_i32_0 = arith.constant 0 : i32
    %c0_i32_1 = arith.constant 0 : i32
    return %c0_i32, %c0_i32_0 : i32, i32
  }
  func.func @transform_15(%arg0: i32, %arg1: i32) -> (i32, i32) {
    %c0_i32 = arith.constant 0 : i32
    %c0_i32_0 = arith.constant 0 : i32
    %c0_i32_1 = arith.constant 0 : i32
    return %c0_i32, %c0_i32_0 : i32, i32
  }
  func.func @transform_16(%arg0: i32, %arg1: i32) -> (i32, i32) {
    %c0_i32 = arith.constant 0 : i32
    %c0_i32_0 = arith.constant 0 : i32
    return %arg0, %c0_i32 : i32, i32
  }
}

</mosaic_0001>

<llo_original>
// kernel: tpu_custom_call.1
$region0: #{tpu_custom_call.1}
  #allocation0 [shape = 'u32[]', space=smem, size = 0x4, offset = 0x4, fixed_abs, tag = 'smem constant byte address 0x4 - core index']
  #allocation1 [shape = 'u32[144,128]{1,0:T(1,128)}', space=vmem, size = 0x12000, scoped, tag = 'internal scratch']
  #allocation2 [shape = 'f32[8,96]{1,0:T(8,128)}', space=vmem, size = 0x1000, scoped, tag = 'scratch operand']
  #allocation3 [shape = 'f32[8,32]{1,0:T(8,128)}', space=vmem, size = 0x1000, scoped, tag = 'scratch operand']
  %s0 = inlined_call_operand.hbm [shape: f32[16,32], index: 0, kind: input, shape index: {}]
  %s1 = inlined_call_operand.vmem [shape: f32[2,1,8], index: 1, kind: input, shape index: {}]
  %s2 = inlined_call_operand.vmem [shape: bf16[2,32,96], index: 2, kind: input, shape index: {}]
  %s3 = inlined_call_operand.vmem [shape: f32[2,1,96], index: 3, kind: input, shape index: {}]
  %s4 = inlined_call_operand.vmem [shape: bf16[2,32,32], index: 4, kind: input, shape index: {}]
  %s5 = inlined_call_operand.vmem [shape: f32[2,1,32], index: 5, kind: input, shape index: {}]
  %s6 = inlined_call_operand.vmem [shape: bf16[2,32,64], index: 6, kind: input, shape index: {}]
  %s7 = inlined_call_operand.vmem [shape: f32[2,1,64], index: 7, kind: input, shape index: {}]
  %s8 = inlined_call_operand.vmem [shape: bf16[2,64,32], index: 8, kind: input, shape index: {}]
  %s9 = inlined_call_operand.vmem [shape: f32[2,1,32], index: 9, kind: input, shape index: {}]
  %s10 = inlined_call_operand.vmem [shape: f32[2,1,32], index: 10, kind: input, shape index: {}]
  %s11 = inlined_call_operand.vmem [shape: f32[2,1,32], index: 11, kind: input, shape index: {}]
  %s12 = inlined_call_operand.vmem [shape: f32[2,1,32], index: 12, kind: input, shape index: {}]
  %s13 = inlined_call_operand.vmem [shape: f32[2,1,32], index: 13, kind: input, shape index: {}]
  %s14 = inlined_call_operand.vmem [shape: f32[1,32], index: 14, kind: input, shape index: {}]
  %s15 = inlined_call_operand.vmem [shape: f32[1,32], index: 15, kind: input, shape index: {}]
  %s16 = inlined_call_operand.hbm [shape: f32[16,32], index: 16, kind: output, shape index: {}]
  %s17 = sld [smem:[#allocation0]]
  $region113: #{tpu_custom_call.1} parent=0
    _
  %s19 = ssub.s32 1, %s17
  %s20 = scalar_select 0, %s19, %s17
  $region1: #{tpu_custom_call.1} parent=0
    #allocation4 [shape = 'u8[8192]{0}', space=vmem, size = 0x2000, scoped, tag = 'input window, operand 0']
    #allocation5 [shape = 's32[2]{0}', space=sflag, size = 0x8, scoped, tag = 'scoped memory for tpu_custom_call.1']
    #allocation6 [shape = 's32[2]{0}', space=sflag, size = 0x8, scoped, tag = 'scoped memory for tpu_custom_call.1']
    #allocation7 [shape = 'u8[8192]{0}', space=vmem, size = 0x2000, scoped, tag = 'output window, operand 0']
    %21 = vsyncpa [#allocation5], 0
    %s22 = scalar_lea.sflag [#allocation5], 1
    %23 = vsyncpa %s22, 0
    %24 = vsyncpa [#allocation6], 0
    %s25 = scalar_lea.sflag [#allocation6], 1
    %26 = vsyncpa %s25, 0
    loop: start=0, step=1, limit=6
    $region2: #{tpu_custom_call.1} parent=1 // loop_pre_header
      _
    $region3: #{tpu_custom_call.1} parent=1 // loop_header
      %s28 = sphi 0, %s32
      %p29 = scmp.ge.s32.totalorder %s28, 6
      %s35 = sphi 0, %s47
      %s36 = sphi 0, %s43
      %s37 = sphi 0, %s35
      %s38 = sphi 0, %s36
      %s39 = sphi 0, %s37
      %s40 = sphi 0, %s38
      %s50 = sphi 0, %s52
      %s53 = sphi 0, %s50
      %s54 = sphi 0, %s53
      %s70 = sphi 0, %s54
      %s76 = sphi 0, %s78
      %s79 = sphi 0, %s76
      %s80 = sphi 0, %s79
      %s96 = sphi 0, %s80
      %s102 = sphi 0, %s104
      %s105 = sphi 0, %s102
      %s106 = sphi 0, %s105
      %s122 = sphi 0, %s106
      %s128 = sphi 0, %s130
      %s131 = sphi 0, %s128
      %s132 = sphi 0, %s131
      %s148 = sphi 0, %s132
      %s154 = sphi 0, %s156
      %s157 = sphi 0, %s154
      %s158 = sphi 0, %s157
      %s174 = sphi 0, %s158
      %s180 = sphi 0, %s182
      %s183 = sphi 0, %s180
      %s184 = sphi 0, %s183
      %s200 = sphi 0, %s184
      %s206 = sphi 0, %s208
      %s209 = sphi 0, %s206
      %s210 = sphi 0, %s209
      %s226 = sphi 0, %s210
      %s232 = sphi 0, %s234
      %s235 = sphi 0, %s232
      %s236 = sphi 0, %s235
      %s252 = sphi 0, %s236
      %s258 = sphi 0, %s260
      %s261 = sphi 0, %s258
      %s262 = sphi 0, %s261
      %s278 = sphi 0, %s262
      %s284 = sphi 0, %s286
      %s287 = sphi 0, %s284
      %s288 = sphi 0, %s287
      %s304 = sphi 0, %s288
      %s310 = sphi 0, %s312
      %s313 = sphi 0, %s310
      %s314 = sphi 0, %s313
      %s330 = sphi 0, %s314
      %s336 = sphi 0, %s338
      %s339 = sphi 0, %s336
      %s340 = sphi 0, %s339
      %s356 = sphi 0, %s340
      %s362 = sphi 0, %s364
      %s365 = sphi 0, %s362
      %s366 = sphi 0, %s365
      %s382 = sphi 0, %s366
      %s388 = sphi 0, %s390
      %s391 = sphi 0, %s388
      %s392 = sphi 0, %s391
      %s408 = sphi 0, %s392
      %s412 = sphi 0, %s412
      %s414 = sphi 0, %s412
      %s415 = sphi 0, %s414
      %s429 = sphi 0, %s415
      %s433 = sphi 0, %s433
      %s435 = sphi 0, %s433
      %s436 = sphi 0, %s435
      %s450 = sphi 0, %s436
      %s456 = sphi 0, %s458
      %s459 = sphi 0, %s456
      %s460 = sphi 0, %s459
      %s476 = sphi 0, %s460
    $region4: #{tpu_custom_call.1} parent=1 // loop_header_branch
      %31 = sbr.rel (%p29) target = $region8
    $region5: #{tpu_custom_call.1} parent=1 // loop_body
      %s33 = ssub.s32 %s28, 1
      %s34 = ssub.s32 %s28, 2
      %s41 = sadd.s32 1, %s36
      %p42 = scmp.ge.s32.totalorder %s41, 2
      %s43 = scalar_select %p42, 0, %s41
      %s44 = sadd.s32 1, %s35
      %s45 = scalar_select %p42, %s44, %s35
      %p46 = scmp.ge.s32.totalorder %s45, 2
      %s47 = scalar_select %p46, 0, %s45
      %s48 = ssub.s32 %s35, %s47
      %p49 = scmp.eq.s32.totalorder %s48, 0
      %s51 = sadd.s32 %s50, 1
      %s52 = scalar_select %p49, %s50, %s51
      %p55 = pneg %p49
      %p56 = scmp.eq.s32.totalorder %s28, 3
      %p57 = por %p55, %p56
      %p58 = scmp.ne.s32.totalorder %s50, %s53
      %p59 = scmp.eq.s32.totalorder %s28, 0
      %p60 = por %p58, %p59
      %p61 = scmp.ne.s32.totalorder %s50, %s53
      %p62 = scmp.eq.s32.totalorder %s33, 3
      %p63 = por %p61, %p62
      %p64 = scmp.ne.s32.totalorder %s53, %s54
      %p65 = scmp.eq.s32.totalorder %s33, 0
      %p66 = por %p64, %p65
      %p67 = scmp.ne.s32.totalorder %s53, %s54
      %p68 = scmp.eq.s32.totalorder %s34, 3
      %p69 = por %p67, %p68
      %p71 = scmp.ne.s32.totalorder %s54, %s70
      %p72 = scmp.eq.s32.totalorder %s34, 0
      %p73 = por %p71, %p72
      %s74 = ssub.s32 %s35, %s47
      %p75 = scmp.eq.s32.totalorder %s74, 0
      %s77 = sadd.s32 %s76, 1
      %s78 = scalar_select %p75, %s76, %s77
      %p81 = pneg %p75
      %p82 = scmp.eq.s32.totalorder %s28, 3
      %p83 = por %p81, %p82
      %p84 = scmp.ne.s32.totalorder %s76, %s79
      %p85 = scmp.eq.s32.totalorder %s28, 0
      %p86 = por %p84, %p85
      %p87 = scmp.ne.s32.totalorder %s76, %s79
      %p88 = scmp.eq.s32.totalorder %s33, 3
      %p89 = por %p87, %p88
      %p90 = scmp.ne.s32.totalorder %s79, %s80
      %p91 = scmp.eq.s32.totalorder %s33, 0
      %p92 = por %p90, %p91
      %p93 = scmp.ne.s32.totalorder %s79, %s80
      %p94 = scmp.eq.s32.totalorder %s34, 3
      %p95 = por %p93, %p94
      %p97 = scmp.ne.s32.totalorder %s80, %s96
      %p98 = scmp.eq.s32.totalorder %s34, 0
      %p99 = por %p97, %p98
      %s100 = ssub.s32 %s36, %s43
      %p101 = scmp.eq.s32.totalorder %s100, 0
      %s103 = sadd.s32 %s102, 1
      %s104 = scalar_select %p101, %s102, %s103
      %p107 = pneg %p101
      %p108 = scmp.eq.s32.totalorder %s28, 3
      %p109 = por %p107, %p108
      %p110 = scmp.ne.s32.totalorder %s102, %s105
      %p111 = scmp.eq.s32.totalorder %s28, 0
      %p112 = por %p110, %p111
      %p113 = scmp.ne.s32.totalorder %s102, %s105
      %p114 = scmp.eq.s32.totalorder %s33, 3
      %p115 = por %p113, %p114
      %p116 = scmp.ne.s32.totalorder %s105, %s106
      %p117 = scmp.eq.s32.totalorder %s33, 0
      %p118 = por %p116, %p117
      %p119 = scmp.ne.s32.totalorder %s105, %s106
      %p120 = scmp.eq.s32.totalorder %s34, 3
      %p121 = por %p119, %p120
      %p123 = scmp.ne.s32.totalorder %s106, %s122
      %p124 = scmp.eq.s32.totalorder %s34, 0
      %p125 = por %p123, %p124
      %s126 = ssub.s32 %s36, %s43
      %p127 = scmp.eq.s32.totalorder %s126, 0
      %s129 = sadd.s32 %s128, 1
      %s130 = scalar_select %p127, %s128, %s129
      %p133 = pneg %p127
      %p134 = scmp.eq.s32.totalorder %s28, 3
      %p135 = por %p133, %p134
      %p136 = scmp.ne.s32.totalorder %s128, %s131
      %p137 = scmp.eq.s32.totalorder %s28, 0
      %p138 = por %p136, %p137
      %p139 = scmp.ne.s32.totalorder %s128, %s131
      %p140 = scmp.eq.s32.totalorder %s33, 3
      %p141 = por %p139, %p140
      %p142 = scmp.ne.s32.totalorder %s131, %s132
      %p143 = scmp.eq.s32.totalorder %s33, 0
      %p144 = por %p142, %p143
      %p145 = scmp.ne.s32.totalorder %s131, %s132
      %p146 = scmp.eq.s32.totalorder %s34, 3
      %p147 = por %p145, %p146
      %p149 = scmp.ne.s32.totalorder %s132, %s148
      %p150 = scmp.eq.s32.totalorder %s34, 0
      %p151 = por %p149, %p150
      %s152 = ssub.s32 %s36, %s43
      %p153 = scmp.eq.s32.totalorder %s152, 0
      %s155 = sadd.s32 %s154, 1
      %s156 = scalar_select %p153, %s154, %s155
      %p159 = pneg %p153
      %p160 = scmp.eq.s32.totalorder %s28, 3
      %p161 = por %p159, %p160
      %p162 = scmp.ne.s32.totalorder %s154, %s157
      %p163 = scmp.eq.s32.totalorder %s28, 0
      %p164 = por %p162, %p163
      %p165 = scmp.ne.s32.totalorder %s154, %s157
      %p166 = scmp.eq.s32.totalorder %s33, 3
      %p167 = por %p165, %p166
      %p168 = scmp.ne.s32.totalorder %s157, %s158
      %p169 = scmp.eq.s32.totalorder %s33, 0
      %p170 = por %p168, %p169
      %p171 = scmp.ne.s32.totalorder %s157, %s158
      %p172 = scmp.eq.s32.totalorder %s34, 3
      %p173 = por %p171, %p172
      %p175 = scmp.ne.s32.totalorder %s158, %s174
      %p176 = scmp.eq.s32.totalorder %s34, 0
      %p177 = por %p175, %p176
      %s178 = ssub.s32 %s36, %s43
      %p179 = scmp.eq.s32.totalorder %s178, 0
      %s181 = sadd.s32 %s180, 1
      %s182 = scalar_select %p179, %s180, %s181
      %p185 = pneg %p179
      %p186 = scmp.eq.s32.totalorder %s28, 3
      %p187 = por %p185, %p186
      %p188 = scmp.ne.s32.totalorder %s180, %s183
      %p189 = scmp.eq.s32.totalorder %s28, 0
      %p190 = por %p188, %p189
      %p191 = scmp.ne.s32.totalorder %s180, %s183
      %p192 = scmp.eq.s32.totalorder %s33, 3
      %p193 = por %p191, %p192
      %p194 = scmp.ne.s32.totalorder %s183, %s184
      %p195 = scmp.eq.s32.totalorder %s33, 0
      %p196 = por %p194, %p195
      %p197 = scmp.ne.s32.totalorder %s183, %s184
      %p198 = scmp.eq.s32.totalorder %s34, 3
      %p199 = por %p197, %p198
      %p201 = scmp.ne.s32.totalorder %s184, %s200
      %p202 = scmp.eq.s32.totalorder %s34, 0
      %p203 = por %p201, %p202
      %s204 = ssub.s32 %s36, %s43
      %p205 = scmp.eq.s32.totalorder %s204, 0
      %s207 = sadd.s32 %s206, 1
      %s208 = scalar_select %p205, %s206, %s207
      %p211 = pneg %p205
      %p212 = scmp.eq.s32.totalorder %s28, 3
      %p213 = por %p211, %p212
      %p214 = scmp.ne.s32.totalorder %s206, %s209
      %p215 = scmp.eq.s32.totalorder %s28, 0
      %p216 = por %p214, %p215
      %p217 = scmp.ne.s32.totalorder %s206, %s209
      %p218 = scmp.eq.s32.totalorder %s33, 3
      %p219 = por %p217, %p218
      %p220 = scmp.ne.s32.totalorder %s209, %s210
      %p221 = scmp.eq.s32.totalorder %s33, 0
      %p222 = por %p220, %p221
      %p223 = scmp.ne.s32.totalorder %s209, %s210
      %p224 = scmp.eq.s32.totalorder %s34, 3
      %p225 = por %p223, %p224
      %p227 = scmp.ne.s32.totalorder %s210, %s226
      %p228 = scmp.eq.s32.totalorder %s34, 0
      %p229 = por %p227, %p228
      %s230 = ssub.s32 %s36, %s43
      %p231 = scmp.eq.s32.totalorder %s230, 0
      %s233 = sadd.s32 %s232, 1
      %s234 = scalar_select %p231, %s232, %s233
      %p237 = pneg %p231
      %p238 = scmp.eq.s32.totalorder %s28, 3
      %p239 = por %p237, %p238
      %p240 = scmp.ne.s32.totalorder %s232, %s235
      %p241 = scmp.eq.s32.totalorder %s28, 0
      %p242 = por %p240, %p241
      %p243 = scmp.ne.s32.totalorder %s232, %s235
      %p244 = scmp.eq.s32.totalorder %s33, 3
      %p245 = por %p243, %p244
      %p246 = scmp.ne.s32.totalorder %s235, %s236
      %p247 = scmp.eq.s32.totalorder %s33, 0
      %p248 = por %p246, %p247
      %p249 = scmp.ne.s32.totalorder %s235, %s236
      %p250 = scmp.eq.s32.totalorder %s34, 3
      %p251 = por %p249, %p250
      %p253 = scmp.ne.s32.totalorder %s236, %s252
      %p254 = scmp.eq.s32.totalorder %s34, 0
      %p255 = por %p253, %p254
      %s256 = ssub.s32 %s36, %s43
      %p257 = scmp.eq.s32.totalorder %s256, 0
      %s259 = sadd.s32 %s258, 1
      %s260 = scalar_select %p257, %s258, %s259
      %p263 = pneg %p257
      %p264 = scmp.eq.s32.totalorder %s28, 3
      %p265 = por %p263, %p264
      %p266 = scmp.ne.s32.totalorder %s258, %s261
      %p267 = scmp.eq.s32.totalorder %s28, 0
      %p268 = por %p266, %p267
      %p269 = scmp.ne.s32.totalorder %s258, %s261
      %p270 = scmp.eq.s32.totalorder %s33, 3
      %p271 = por %p269, %p270
      %p272 = scmp.ne.s32.totalorder %s261, %s262
      %p273 = scmp.eq.s32.totalorder %s33, 0
      %p274 = por %p272, %p273
      %p275 = scmp.ne.s32.totalorder %s261, %s262
      %p276 = scmp.eq.s32.totalorder %s34, 3
      %p277 = por %p275, %p276
      %p279 = scmp.ne.s32.totalorder %s262, %s278
      %p280 = scmp.eq.s32.totalorder %s34, 0
      %p281 = por %p279, %p280
      %s282 = ssub.s32 %s36, %s43
      %p283 = scmp.eq.s32.totalorder %s282, 0
      %s285 = sadd.s32 %s284, 1
      %s286 = scalar_select %p283, %s284, %s285
      %p289 = pneg %p283
      %p290 = scmp.eq.s32.totalorder %s28, 3
      %p291 = por %p289, %p290
      %p292 = scmp.ne.s32.totalorder %s284, %s287
      %p293 = scmp.eq.s32.totalorder %s28, 0
      %p294 = por %p292, %p293
      %p295 = scmp.ne.s32.totalorder %s284, %s287
      %p296 = scmp.eq.s32.totalorder %s33, 3
      %p297 = por %p295, %p296
      %p298 = scmp.ne.s32.totalorder %s287, %s288
      %p299 = scmp.eq.s32.totalorder %s33, 0
      %p300 = por %p298, %p299
      %p301 = scmp.ne.s32.totalorder %s287, %s288
      %p302 = scmp.eq.s32.totalorder %s34, 3
      %p303 = por %p301, %p302
      %p305 = scmp.ne.s32.totalorder %s288, %s304
      %p306 = scmp.eq.s32.totalorder %s34, 0
      %p307 = por %p305, %p306
      %s308 = ssub.s32 %s36, %s43
      %p309 = scmp.eq.s32.totalorder %s308, 0
      %s311 = sadd.s32 %s310, 1
      %s312 = scalar_select %p309, %s310, %s311
      %p315 = pneg %p309
      %p316 = scmp.eq.s32.totalorder %s28, 3
      %p317 = por %p315, %p316
      %p318 = scmp.ne.s32.totalorder %s310, %s313
      %p319 = scmp.eq.s32.totalorder %s28, 0
      %p320 = por %p318, %p319
      %p321 = scmp.ne.s32.totalorder %s310, %s313
      %p322 = scmp.eq.s32.totalorder %s33, 3
      %p323 = por %p321, %p322
      %p324 = scmp.ne.s32.totalorder %s313, %s314
      %p325 = scmp.eq.s32.totalorder %s33, 0
      %p326 = por %p324, %p325
      %p327 = scmp.ne.s32.totalorder %s313, %s314
      %p328 = scmp.eq.s32.totalorder %s34, 3
      %p329 = por %p327, %p328
      %p331 = scmp.ne.s32.totalorder %s314, %s330
      %p332 = scmp.eq.s32.totalorder %s34, 0
      %p333 = por %p331, %p332
      %s334 = ssub.s32 %s36, %s43
      %p335 = scmp.eq.s32.totalorder %s334, 0
      %s337 = sadd.s32 %s336, 1
      %s338 = scalar_select %p335, %s336, %s337
      %p341 = pneg %p335
      %p342 = scmp.eq.s32.totalorder %s28, 3
      %p343 = por %p341, %p342
      %p344 = scmp.ne.s32.totalorder %s336, %s339
      %p345 = scmp.eq.s32.totalorder %s28, 0
      %p346 = por %p344, %p345
      %p347 = scmp.ne.s32.totalorder %s336, %s339
      %p348 = scmp.eq.s32.totalorder %s33, 3
      %p349 = por %p347, %p348
      %p350 = scmp.ne.s32.totalorder %s339, %s340
      %p351 = scmp.eq.s32.totalorder %s33, 0
      %p352 = por %p350, %p351
      %p353 = scmp.ne.s32.totalorder %s339, %s340
      %p354 = scmp.eq.s32.totalorder %s34, 3
      %p355 = por %p353, %p354
      %p357 = scmp.ne.s32.totalorder %s340, %s356
      %p358 = scmp.eq.s32.totalorder %s34, 0
      %p359 = por %p357, %p358
      %s360 = ssub.s32 %s36, %s43
      %p361 = scmp.eq.s32.totalorder %s360, 0
      %s363 = sadd.s32 %s362, 1
      %s364 = scalar_select %p361, %s362, %s363
      %p367 = pneg %p361
      %p368 = scmp.eq.s32.totalorder %s28, 3
      %p369 = por %p367, %p368
      %p370 = scmp.ne.s32.totalorder %s362, %s365
      %p371 = scmp.eq.s32.totalorder %s28, 0
      %p372 = por %p370, %p371
      %p373 = scmp.ne.s32.totalorder %s362, %s365
      %p374 = scmp.eq.s32.totalorder %s33, 3
      %p375 = por %p373, %p374
      %p376 = scmp.ne.s32.totalorder %s365, %s366
      %p377 = scmp.eq.s32.totalorder %s33, 0
      %p378 = por %p376, %p377
      %p379 = scmp.ne.s32.totalorder %s365, %s366
      %p380 = scmp.eq.s32.totalorder %s34, 3
      %p381 = por %p379, %p380
      %p383 = scmp.ne.s32.totalorder %s366, %s382
      %p384 = scmp.eq.s32.totalorder %s34, 0
      %p385 = por %p383, %p384
      %s386 = ssub.s32 %s36, %s43
      %p387 = scmp.eq.s32.totalorder %s386, 0
      %s389 = sadd.s32 %s388, 1
      %s390 = scalar_select %p387, %s388, %s389
      %p393 = pneg %p387
      %p394 = scmp.eq.s32.totalorder %s28, 3
      %p395 = por %p393, %p394
      %p396 = scmp.ne.s32.totalorder %s388, %s391
      %p397 = scmp.eq.s32.totalorder %s28, 0
      %p398 = por %p396, %p397
      %p399 = scmp.ne.s32.totalorder %s388, %s391
      %p400 = scmp.eq.s32.totalorder %s33, 3
      %p401 = por %p399, %p400
      %p402 = scmp.ne.s32.totalorder %s391, %s392
      %p403 = scmp.eq.s32.totalorder %s33, 0
      %p404 = por %p402, %p403
      %p405 = scmp.ne.s32.totalorder %s391, %s392
      %p406 = scmp.eq.s32.totalorder %s34, 3
      %p407 = por %p405, %p406
      %p409 = scmp.ne.s32.totalorder %s392, %s408
      %p410 = scmp.eq.s32.totalorder %s34, 0
      %p411 = por %p409, %p410
      %s413 = sadd.s32 %s412, 1
      %p416 = scmp.eq.s32.totalorder %s28, 3
      %p417 = scmp.ne.s32.totalorder %s412, %s414
      %p418 = scmp.eq.s32.totalorder %s28, 0
      %p419 = por %p417, %p418
      %p420 = scmp.ne.s32.totalorder %s412, %s414
      %p421 = scmp.eq.s32.totalorder %s33, 3
      %p422 = por %p420, %p421
      %p423 = scmp.ne.s32.totalorder %s414, %s415
      %p424 = scmp.eq.s32.totalorder %s33, 0
      %p425 = por %p423, %p424
      %p426 = scmp.ne.s32.totalorder %s414, %s415
      %p427 = scmp.eq.s32.totalorder %s34, 3
      %p428 = por %p426, %p427
      %p430 = scmp.ne.s32.totalorder %s415, %s429
      %p431 = scmp.eq.s32.totalorder %s34, 0
      %p432 = por %p430, %p431
      %s434 = sadd.s32 %s433, 1
      %p437 = scmp.eq.s32.totalorder %s28, 3
      %p438 = scmp.ne.s32.totalorder %s433, %s435
      %p439 = scmp.eq.s32.totalorder %s28, 0
      %p440 = por %p438, %p439
      %p441 = scmp.ne.s32.totalorder %s433, %s435
      %p442 = scmp.eq.s32.totalorder %s33, 3
      %p443 = por %p441, %p442
      %p444 = scmp.ne.s32.totalorder %s435, %s436
      %p445 = scmp.eq.s32.totalorder %s33, 0
      %p446 = por %p444, %p445
      %p447 = scmp.ne.s32.totalorder %s435, %s436
      %p448 = scmp.eq.s32.totalorder %s34, 3
      %p449 = por %p447, %p448
      %p451 = scmp.ne.s32.totalorder %s436, %s450
      %p452 = scmp.eq.s32.totalorder %s34, 0
      %p453 = por %p451, %p452
      %s454 = ssub.s32 %s35, %s47
      %p455 = scmp.eq.s32.totalorder %s454, 0
      %s457 = sadd.s32 %s456, 1
      %s458 = scalar_select %p455, %s456, %s457
      %p461 = pneg %p455
      %p462 = scmp.eq.s32.totalorder %s28, 3
      %p463 = por %p461, %p462
      %p464 = scmp.ne.s32.totalorder %s456, %s459
      %p465 = scmp.eq.s32.totalorder %s28, 0
      %p466 = por %p464, %p465
      %p467 = scmp.ne.s32.totalorder %s456, %s459
      %p468 = scmp.eq.s32.totalorder %s33, 3
      %p469 = por %p467, %p468
      %p470 = scmp.ne.s32.totalorder %s459, %s460
      %p471 = scmp.eq.s32.totalorder %s33, 0
      %p472 = por %p470, %p471
      %p473 = scmp.ne.s32.totalorder %s459, %s460
      %p474 = scmp.eq.s32.totalorder %s34, 3
      %p475 = por %p473, %p474
      %p477 = scmp.ne.s32.totalorder %s460, %s476
      %p478 = scmp.eq.s32.totalorder %s34, 0
      %p479 = por %p477, %p478
      %p480 = scmp.le.s32.totalorder 1, %s28
      %p481 = scmp.lt.s32.totalorder %s28, 5
      %p482 = pnand %p480, %p481
      %p483 = pneg %p482
      // Predicated region
      $region9: #{tpu_custom_call.1} parent=5 // pred_check
        _
      $region10: #{tpu_custom_call.1} parent=5 // pred_check_branch
        %485 = sbr.rel (%p482) target = $region12
      $region11: #{tpu_custom_call.1} parent=5 // pred_region
        %s486 = ssub.s32 %s28, 1
        // Predicated region
        $region13: #{tpu_custom_call.1} parent=11 // pred_check
          %p487 = pneg %p425
        $region14: #{tpu_custom_call.1} parent=11 // pred_check_branch
          %489 = sbr.rel (%p487) target = $region16
        $region15: #{tpu_custom_call.1} parent=11 // pred_region
          _
        $region16: #{tpu_custom_call.1} parent=11 // pred_fallthru
          _
        // Predicated region
        $region17: #{tpu_custom_call.1} parent=11 // pred_check
          %p490 = pneg %p446
        $region18: #{tpu_custom_call.1} parent=11 // pred_check_branch
          %492 = sbr.rel (%p490) target = $region20
        $region19: #{tpu_custom_call.1} parent=11 // pred_region
          _
        $region20: #{tpu_custom_call.1} parent=11 // pred_fallthru
          _
      $region12: #{tpu_custom_call.1} parent=5 // pred_fallthru
        _
      %p493 = scmp.lt.s32.totalorder %s28, 4
      // Predicated region
      $region21: #{tpu_custom_call.1} parent=5 // pred_check
        %p494 = pneg %p493
      $region22: #{tpu_custom_call.1} parent=5 // pred_check_branch
        %496 = sbr.rel (%p494) target = $region24
      $region23: #{tpu_custom_call.1} parent=5 // pred_region
        // Predicated region
        $region25: #{tpu_custom_call.1} parent=23 // pred_check
          %p497 = pneg %p60
        $region26: #{tpu_custom_call.1} parent=23 // pred_check_branch
          %499 = sbr.rel (%p497) target = $region28
        $region27: #{tpu_custom_call.1} parent=23 // pred_region
          %s500 = sand.u32 %s50, 1
          %s501 = scalar_lea.sflag [#allocation5], %s500
          %s502 = sand.u32 %s50, 1
          %s503 = smul.addr %s502, 8
          %s504 = scalar_lea.vmem [#allocation4], %s503
          %s506 = ssub.s32 128, 128
          %507 = vsyncadd %s501, %s506
          %s508 = smul.addr %s35, 128
          %s509 = scalar_lea.hbm %s0, %s508
          %s511 = sshll.u32 %s504, 4
          %s512 = int_to_ptr.vmem [resolvable:$true] %s511
          %514 = dma.hbm_to_vmem [thread:$0]  %s509, 128, %s512, %s501
        $region28: #{tpu_custom_call.1} parent=23 // pred_fallthru
          _
        // Predicated region
        $region29: #{tpu_custom_call.1} parent=23 // pred_check
          %p515 = pneg %p86
        $region30: #{tpu_custom_call.1} parent=23 // pred_check_branch
          %517 = sbr.rel (%p515) target = $region32
        $region31: #{tpu_custom_call.1} parent=23 // pred_region
          %p518 = scmp.lt.s32.totalorder %s35, 1
          %s519 = scalar_select %p518, %s35, 1
          %s520 = scalar_lea.vmem %s1, %s519
        $region32: #{tpu_custom_call.1} parent=23 // pred_fallthru
          _
        // Predicated region
        $region33: #{tpu_custom_call.1} parent=23 // pred_check
          %p521 = pneg %p112
        $region34: #{tpu_custom_call.1} parent=23 // pred_check_branch
          %523 = sbr.rel (%p521) target = $region36
        $region35: #{tpu_custom_call.1} parent=23 // pred_region
          %p524 = scmp.lt.s32.totalorder %s36, 1
          %s525 = scalar_select %p524, %s36, 1
          %s526 = smul.addr %s525, 4
          %s527 = smul.addr %s526, 4
          %s528 = scalar_lea.vmem %s2, %s527
        $region36: #{tpu_custom_call.1} parent=23 // pred_fallthru
          _
        // Predicated region
        $region37: #{tpu_custom_call.1} parent=23 // pred_check
          %p529 = pneg %p138
        $region38: #{tpu_custom_call.1} parent=23 // pred_check_branch
          %531 = sbr.rel (%p529) target = $region40
        $region39: #{tpu_custom_call.1} parent=23 // pred_region
          %p532 = scmp.lt.s32.totalorder %s36, 1
          %s533 = scalar_select %p532, %s36, 1
          %s534 = scalar_lea.vmem %s3, %s533
        $region40: #{tpu_custom_call.1} parent=23 // pred_fallthru
          _
        // Predicated region
        $region41: #{tpu_custom_call.1} parent=23 // pred_check
          %p535 = pneg %p164
        $region42: #{tpu_custom_call.1} parent=23 // pred_check_branch
          %537 = sbr.rel (%p535) target = $region44
        $region43: #{tpu_custom_call.1} parent=23 // pred_region
          %p538 = scmp.lt.s32.totalorder %s36, 1
          %s539 = scalar_select %p538, %s36, 1
          %s540 = smul.addr %s539, 4
          %s541 = smul.addr %s540, 4
          %s542 = scalar_lea.vmem %s4, %s541
        $region44: #{tpu_custom_call.1} parent=23 // pred_fallthru
          _
        // Predicated region
        $region45: #{tpu_custom_call.1} parent=23 // pred_check
          %p543 = pneg %p190
        $region46: #{tpu_custom_call.1} parent=23 // pred_check_branch
          %545 = sbr.rel (%p543) target = $region48
        $region47: #{tpu_custom_call.1} parent=23 // pred_region
          %p546 = scmp.lt.s32.totalorder %s36, 1
          %s547 = scalar_select %p546, %s36, 1
          %s548 = scalar_lea.vmem %s5, %s547
        $region48: #{tpu_custom_call.1} parent=23 // pred_fallthru
          _
        // Predicated region
        $region49: #{tpu_custom_call.1} parent=23 // pred_check
          %p549 = pneg %p216
        $region50: #{tpu_custom_call.1} parent=23 // pred_check_branch
          %551 = sbr.rel (%p549) target = $region52
        $region51: #{tpu_custom_call.1} parent=23 // pred_region
          %p552 = scmp.lt.s32.totalorder %s36, 1
          %s553 = scalar_select %p552, %s36, 1
          %s554 = smul.addr %s553, 4
          %s555 = smul.addr %s554, 4
          %s556 = scalar_lea.vmem %s6, %s555
        $region52: #{tpu_custom_call.1} parent=23 // pred_fallthru
          _
        // Predicated region
        $region53: #{tpu_custom_call.1} parent=23 // pred_check
          %p557 = pneg %p242
        $region54: #{tpu_custom_call.1} parent=23 // pred_check_branch
          %559 = sbr.rel (%p557) target = $region56
        $region55: #{tpu_custom_call.1} parent=23 // pred_region
          %p560 = scmp.lt.s32.totalorder %s36, 1
          %s561 = scalar_select %p560, %s36, 1
          %s562 = scalar_lea.vmem %s7, %s561
        $region56: #{tpu_custom_call.1} parent=23 // pred_fallthru
          _
        // Predicated region
        $region57: #{tpu_custom_call.1} parent=23 // pred_check
          %p563 = pneg %p268
        $region58: #{tpu_custom_call.1} parent=23 // pred_check_branch
          %565 = sbr.rel (%p563) target = $region60
        $region59: #{tpu_custom_call.1} parent=23 // pred_region
          %p566 = scmp.lt.s32.totalorder %s36, 1
          %s567 = scalar_select %p566, %s36, 1
          %s568 = smul.addr %s567, 8
          %s569 = smul.addr %s568, 4
          %s570 = scalar_lea.vmem %s8, %s569
        $region60: #{tpu_custom_call.1} parent=23 // pred_fallthru
          _
        // Predicated region
        $region61: #{tpu_custom_call.1} parent=23 // pred_check
          %p571 = pneg %p294
        $region62: #{tpu_custom_call.1} parent=23 // pred_check_branch
          %573 = sbr.rel (%p571) target = $region64
        $region63: #{tpu_custom_call.1} parent=23 // pred_region
          %p574 = scmp.lt.s32.totalorder %s36, 1
          %s575 = scalar_select %p574, %s36, 1
          %s576 = scalar_lea.vmem %s9, %s575
        $region64: #{tpu_custom_call.1} parent=23 // pred_fallthru
          _
        // Predicated region
        $region65: #{tpu_custom_call.1} parent=23 // pred_check
          %p577 = pneg %p320
        $region66: #{tpu_custom_call.1} parent=23 // pred_check_branch
          %579 = sbr.rel (%p577) target = $region68
        $region67: #{tpu_custom_call.1} parent=23 // pred_region
          %p580 = scmp.lt.s32.totalorder %s36, 1
          %s581 = scalar_select %p580, %s36, 1
          %s582 = scalar_lea.vmem %s10, %s581
        $region68: #{tpu_custom_call.1} parent=23 // pred_fallthru
          _
        // Predicated region
        $region69: #{tpu_custom_call.1} parent=23 // pred_check
          %p583 = pneg %p346
        $region70: #{tpu_custom_call.1} parent=23 // pred_check_branch
          %585 = sbr.rel (%p583) target = $region72
        $region71: #{tpu_custom_call.1} parent=23 // pred_region
          %p586 = scmp.lt.s32.totalorder %s36, 1
          %s587 = scalar_select %p586, %s36, 1
          %s588 = scalar_lea.vmem %s11, %s587
        $region72: #{tpu_custom_call.1} parent=23 // pred_fallthru
          _
        // Predicated region
        $region73: #{tpu_custom_call.1} parent=23 // pred_check
          %p589 = pneg %p372
        $region74: #{tpu_custom_call.1} parent=23 // pred_check_branch
          %591 = sbr.rel (%p589) target = $region76
        $region75: #{tpu_custom_call.1} parent=23 // pred_region
          %p592 = scmp.lt.s32.totalorder %s36, 1
          %s593 = scalar_select %p592, %s36, 1
          %s594 = scalar_lea.vmem %s12, %s593
        $region76: #{tpu_custom_call.1} parent=23 // pred_fallthru
          _
        // Predicated region
        $region77: #{tpu_custom_call.1} parent=23 // pred_check
          %p595 = pneg %p398
        $region78: #{tpu_custom_call.1} parent=23 // pred_check_branch
          %597 = sbr.rel (%p595) target = $region80
        $region79: #{tpu_custom_call.1} parent=23 // pred_region
          %p598 = scmp.lt.s32.totalorder %s36, 1
          %s599 = scalar_select %p598, %s36, 1
          %s600 = scalar_lea.vmem %s13, %s599
        $region80: #{tpu_custom_call.1} parent=23 // pred_fallthru
          _
      $region24: #{tpu_custom_call.1} parent=5 // pred_fallthru
        _
      %p601 = scmp.le.s32.totalorder 1, %s28
      %p602 = scmp.lt.s32.totalorder %s28, 5
      %p603 = pnand %p601, %p602
      %p604 = pneg %p603
      // Predicated region
      $region81: #{tpu_custom_call.1} parent=5 // pred_check
        _
      $region82: #{tpu_custom_call.1} parent=5 // pred_check_branch
        %606 = sbr.rel (%p603) target = $region84
      $region83: #{tpu_custom_call.1} parent=5 // pred_region
        %s607 = ssub.s32 %s28, 1
        %s608 = sand.u32 %s53, 1
        %s609 = scalar_lea.sflag [#allocation5], %s608
        %s610 = sand.u32 %s53, 1
        %s611 = smul.addr %s610, 8
        %s612 = scalar_lea.vmem [#allocation4], %s611
        // Predicated region
        $region85: #{tpu_custom_call.1} parent=83 // pred_check
          %p613 = pneg %p66
        $region86: #{tpu_custom_call.1} parent=83 // pred_check_branch
          %615 = sbr.rel (%p613) target = $region88
        $region87: #{tpu_custom_call.1} parent=83 // pred_region
          %616 = dma.done %s609, 128
        $region88: #{tpu_custom_call.1} parent=83 // pred_fallthru
          _
        %s617 = sand.u32 %s53, 1
        %s618 = scalar_lea.sflag [#allocation5], %s617
        %s619 = sand.u32 %s53, 1
        %s620 = smul.addr %s619, 8
        %s621 = scalar_lea.vmem [#allocation4], %s620
        %p622 = pneg %p66
        %p623 = pneg %p63
        %p624 = scmp.lt.s32.totalorder %s37, 1
        %s625 = scalar_select %p624, %s37, 1
        %s626 = scalar_lea.vmem %s1, %s625
        %p627 = pneg %p92
        %p628 = pneg %p89
        %p629 = scmp.lt.s32.totalorder %s38, 1
        %s630 = scalar_select %p629, %s38, 1
        %s631 = smul.addr %s630, 4
        %s632 = smul.addr %s631, 4
        %s633 = scalar_lea.vmem %s2, %s632
        %p634 = pneg %p118
        %p635 = pneg %p115
        %p636 = scmp.lt.s32.totalorder %s38, 1
        %s637 = scalar_select %p636, %s38, 1
        %s638 = scalar_lea.vmem %s3, %s637
        %p639 = pneg %p144
        %p640 = pneg %p141
        %p641 = scmp.lt.s32.totalorder %s38, 1
        %s642 = scalar_select %p641, %s38, 1
        %s643 = smul.addr %s642, 4
        %s644 = smul.addr %s643, 4
        %s645 = scalar_lea.vmem %s4, %s644
        %p646 = pneg %p170
        %p647 = pneg %p167
        %p648 = scmp.lt.s32.totalorder %s38, 1
        %s649 = scalar_select %p648, %s38, 1
        %s650 = scalar_lea.vmem %s5, %s649
        %p651 = pneg %p196
        %p652 = pneg %p193
        %p653 = scmp.lt.s32.totalorder %s38, 1
        %s654 = scalar_select %p653, %s38, 1
        %s655 = smul.addr %s654, 4
        %s656 = smul.addr %s655, 4
        %s657 = scalar_lea.vmem %s6, %s656
        %p658 = pneg %p222
        %p659 = pneg %p219
        %p660 = scmp.lt.s32.totalorder %s38, 1
        %s661 = scalar_select %p660, %s38, 1
        %s662 = scalar_lea.vmem %s7, %s661
        %p663 = pneg %p248
        %p664 = pneg %p245
        %p665 = scmp.lt.s32.totalorder %s38, 1
        %s666 = scalar_select %p665, %s38, 1
        %s667 = smul.addr %s666, 8
        %s668 = smul.addr %s667, 4
        %s669 = scalar_lea.vmem %s8, %s668
        %p670 = pneg %p274
        %p671 = pneg %p271
        %p672 = scmp.lt.s32.totalorder %s38, 1
        %s673 = scalar_select %p672, %s38, 1
        %s674 = scalar_lea.vmem %s9, %s673
        %p675 = pneg %p300
        %p676 = pneg %p297
        %p677 = scmp.lt.s32.totalorder %s38, 1
        %s678 = scalar_select %p677, %s38, 1
        %s679 = scalar_lea.vmem %s10, %s678
        %p680 = pneg %p326
        %p681 = pneg %p323
        %p682 = scmp.lt.s32.totalorder %s38, 1
        %s683 = scalar_select %p682, %s38, 1
        %s684 = scalar_lea.vmem %s11, %s683
        %p685 = pneg %p352
        %p686 = pneg %p349
        %p687 = scmp.lt.s32.totalorder %s38, 1
        %s688 = scalar_select %p687, %s38, 1
        %s689 = scalar_lea.vmem %s12, %s688
        %p690 = pneg %p378
        %p691 = pneg %p375
        %p692 = scmp.lt.s32.totalorder %s38, 1
        %s693 = scalar_select %p692, %s38, 1
        %s694 = scalar_lea.vmem %s13, %s693
        %p695 = pneg %p404
        %p696 = pneg %p401
        %p697 = pneg %p425
        %p698 = pneg %p422
        %p699 = pneg %p446
        %p700 = pneg %p443
        %p701 = pneg %p472
        %p702 = pneg %p469
        %s703 = sand.u32 %s459, 1
        %s704 = scalar_lea.sflag [#allocation6], %s703
        %s705 = sand.u32 %s459, 1
        %s706 = smul.addr %s705, 8
        %s707 = scalar_lea.vmem [#allocation7], %s706
        %p708 = scmp.lt.s32.totalorder %s37, 1
        %s709 = scalar_select %p708, %s37, 1
        %s710 = scalar_lea.vmem %s1, %s709
        %p711 = scmp.lt.s32.totalorder %s38, 1
        %s712 = scalar_select %p711, %s38, 1
        %s713 = smul.addr %s712, 4
        %s714 = smul.addr %s713, 4
        %s715 = scalar_lea.vmem %s2, %s714
        %p716 = scmp.lt.s32.totalorder %s38, 1
        %s717 = scalar_select %p716, %s38, 1
        %s718 = scalar_lea.vmem %s3, %s717
        %p719 = scmp.lt.s32.totalorder %s38, 1
        %s720 = scalar_select %p719, %s38, 1
        %s721 = smul.addr %s720, 4
        %s722 = smul.addr %s721, 4
        %s723 = scalar_lea.vmem %s4, %s722
        %p724 = scmp.lt.s32.totalorder %s38, 1
        %s725 = scalar_select %p724, %s38, 1
        %s726 = scalar_lea.vmem %s5, %s725
        %p727 = scmp.lt.s32.totalorder %s38, 1
        %s728 = scalar_select %p727, %s38, 1
        %s729 = smul.addr %s728, 4
        %s730 = smul.addr %s729, 4
        %s731 = scalar_lea.vmem %s6, %s730
        %p732 = scmp.lt.s32.totalorder %s38, 1
        %s733 = scalar_select %p732, %s38, 1
        %s734 = scalar_lea.vmem %s7, %s733
        %p735 = scmp.lt.s32.totalorder %s38, 1
        %s736 = scalar_select %p735, %s38, 1
        %s737 = smul.addr %s736, 8
        %s738 = smul.addr %s737, 4
        %s739 = scalar_lea.vmem %s8, %s738
        %p740 = scmp.lt.s32.totalorder %s38, 1
        %s741 = scalar_select %p740, %s38, 1
        %s742 = scalar_lea.vmem %s9, %s741
        %p743 = scmp.lt.s32.totalorder %s38, 1
        %s744 = scalar_select %p743, %s38, 1
        %s745 = scalar_lea.vmem %s10, %s744
        %p746 = scmp.lt.s32.totalorder %s38, 1
        %s747 = scalar_select %p746, %s38, 1
        %s748 = scalar_lea.vmem %s11, %s747
        %p749 = scmp.lt.s32.totalorder %s38, 1
        %s750 = scalar_select %p749, %s38, 1
        %s751 = scalar_lea.vmem %s12, %s750
        %p752 = scmp.lt.s32.totalorder %s38, 1
        %s753 = scalar_select %p752, %s38, 1
        %s754 = scalar_lea.vmem %s13, %s753
        %p756 = scmp.eq.s32.totalorder %s38, 0
        // Predicated region
        $region89: #{tpu_custom_call.1} parent=83 // pred_check
          %p757 = pneg %p756
        $region90: #{tpu_custom_call.1} parent=83 // pred_check_branch
          %759 = sbr.rel (%p757) target = $region92
        $region91: #{tpu_custom_call.1} parent=83 // pred_region
          %v760 = vld [vmem:[%s612] sm:$0xff]
          %vm761 = vcmask 261120
          %762 = vst.msk [vmem:[%s707] sm:$0xff] %vm761, %v760
        $region92: #{tpu_custom_call.1} parent=83 // pred_fallthru
          _
        %v763 = vld [vmem:[%s707] sm:$0xff]
        %v764 = vld [vmem:[%s710] sm:$0x1]
        %v765 = vsub.f32 %v764, 1.0
        %v766 = vmul.f32 %v765, 1e+30
        %v767 = vld [vmem:[%s745] sm:$0x1]
        %v768 = vld [vmem:[%s748] sm:$0x1]
        %vm769 = vcmask 261120
        %v770 = vsel %vm769, %v763, 0.0
        %771 = vadd.xlane.f32.xlu0 %v770
        %v772 = vpop.xlane.xlu0 %771
        %v773 = vrcp.pop 32.0
        %v774 = vmul.f32 %v772, %v773
        %v775 = vsub.f32 %v763, %v774
        %v776 = vmul.f32 %v775, %v775
        %v777 = vsel %vm769, %v776, 0.0
        %778 = vadd.xlane.f32.xlu0 %v777
        %v779 = vpop.xlane.xlu0 %778
        %v780 = vmul.f32 %v779, %v773
        %v781 = vadd.f32 %v780, 1e-12
        %v782 = vrsqrt.pop %v781
        %v783 = vmul.f32 %v775, %v782
        %v785 = vlaneseq
        %v786 = vshrl.u32 %v785, 7
        %v787 = vsub.s32 0, %v786
        %v788 = vrot.slane %v767, %v787
        %v790 = vmul.f32 %v783, %v788
        %v792 = vlaneseq
        %v793 = vshrl.u32 %v792, 7
        %v794 = vsub.s32 0, %v793
        %v795 = vrot.slane %v768, %v794
        %v797 = vadd.f32 %v790, %v795
        %v798 = vpack.c.bf16 %v797, %v797
        %v799 = vld [vmem:[%s715] sm:$0xf]
        %v800 = vld [vmem:[%s715 + $0x4] sm:$0xf]
        %v801 = vld [vmem:[%s715 + $0x8] sm:$0xf]
        %v802 = vld [vmem:[%s715 + $0xc] sm:$0xf]
        %v803 = vld [vmem:[%s718] sm:$0x1]
        %v805 = vlaneseq
        %v806 = vshrl.u32 %v805, 7
        %v807 = vsub.s32 0, %v806
        %v808 = vrot.slane %v803, %v807
        %v814 = vunpack.c.l.b16 %v799
        %v815 = vunpack.c.l.b16 %v800
        %v816 = vunpack.c.l.b16 %v801
        %v817 = vunpack.c.l.b16 %v802
        %v818 = vpack.c.b16 %v815, %v814
        %v819 = vpack.c.b16 %v817, %v816
        %v823 = vsel %vm769, %v798, 0
        %825 = vmatprep.subr.bf16.mxu0 0
        %826 = vmatpush1.bf16.msra.mxu0 %v818
        %827 = vmatprep.subr.bf16.mxu0 0
        %828 = vmatpush1.bf16.msra.mxu0 %v819
        %829 = vmatprep.subr.bf16.mxu0 0
        %830 = vmatpush1.bf16.msra.mxu0 0
        %831 = vmatprep.subr.bf16.mxu0 0
        %832 = vmatpush1.bf16.msra.mxu0 0
        %833 = vmatprep.subr.bf16.mxu0 0
        %834 = vmatpush1.bf16.msra.mxu0 0
        %835 = vmatprep.subr.bf16.mxu0 0
        %836 = vmatpush1.bf16.msra.mxu0 0
        %837 = vmatprep.subr.bf16.mxu0 0
        %838 = vmatpush1.bf16.msra.mxu0 0
        %839 = vmatprep.subr.bf16.mxu0 0
        %840 = vmatpush1.bf16.msra.mxu0 0
        %841 = vmatprep.subr.bf16.mxu0 0
        %842 = vmatpush1.bf16.msra.mxu0 0
        %843 = vmatprep.subr.bf16.mxu0 0
        %844 = vmatpush1.bf16.msra.mxu0 0
        %845 = vmatprep.subr.bf16.mxu0 0
        %846 = vmatpush1.bf16.msra.mxu0 0
        %847 = vmatprep.subr.bf16.mxu0 0
        %848 = vmatpush1.bf16.msra.mxu0 0
        %849 = vmatprep.subr.bf16.mxu0 0
        %850 = vmatpush1.bf16.msra.mxu0 0
        %851 = vmatprep.subr.bf16.mxu0 0
        %852 = vmatpush1.bf16.msra.mxu0 0
        %853 = vmatprep.subr.bf16.mxu0 0
        %854 = vmatpush1.bf16.msra.mxu0 0
        %855 = vmatprep.subr.bf16.mxu0 0
        %856 = vmatpush1.bf16.msra.mxu0 0
        %857 = vmatprep.mubr.bf16.mxu0 0
        %858 = vmatmul.mubr.bf16.gmra.mrb[0].mxu0 %v823
        %v859 = vpop.f32.mrb[0].mxu0
        %v860 = vadd.f32 %v808, %v859
        %v861 = vpop.f32.mrb[0].mxu0
        %v862 = vpop.f32.mrb[0].mxu0
        %v863 = vpop.f32.mrb[0].mxu0
        %864 = vdwg.mxu0
        %vm865 = vcmask 785408
        %866 = vst.msk [vmem:[#allocation2] sm:$0xff] %vm865, %v860
        %v867 = vld [vmem:[#allocation2] sm:$0xff]
        %v868 = vmul.f32 %v867, 0.35355338
        %v869 = vpack.c.bf16 %v868, %v868
        %v870 = vpack.c.bf16 %v867, %v867
        %v872 = vlaneseq
        %v873 = vshrl.u32 %v872, 7
        %v874 = vsub.s32 0, %v873
        %v875 = vrot.slane %v766, %v874
        %878 = vrot.lane.b32.xlu0 %v870, 96
        %v879 = vpop.permute.xlu0 %878
        %vm880 = vcmask 64512
        %v882 = vsel %vm880, %v869, 0
        %v885 = vsel %vm880, %v879, 0
        %887 = vmatprep.subr.bf16.mxu0 0
        %888 = vmatpush1.bf16.xpose.msra.mxu0 %v885
        %889 = vmatprep.subr.bf16.mxu0 0
        %890 = vmatpush1.bf16.xpose.msra.mxu0 0
        %891 = vmatprep.subr.bf16.mxu0 0
        %892 = vmatpush1.bf16.xpose.msra.mxu0 0
        %893 = vmatprep.subr.bf16.mxu0 0
        %894 = vmatpush1.bf16.xpose.msra.mxu0 0
        %895 = vmatprep.subr.bf16.mxu0 0
        %896 = vmatpush1.bf16.xpose.msra.mxu0 0
        %897 = vmatprep.subr.bf16.mxu0 0
        %898 = vmatpush1.bf16.xpose.msra.mxu0 0
        %899 = vmatprep.subr.bf16.mxu0 0
        %900 = vmatpush1.bf16.xpose.msra.mxu0 0
        %901 = vmatprep.subr.bf16.mxu0 0
        %902 = vmatpush1.bf16.xpose.msra.mxu0 0
        %903 = vmatprep.subr.bf16.mxu0 0
        %904 = vmatpush1.bf16.xpose.msra.mxu0 0
        %905 = vmatprep.subr.bf16.mxu0 0
        %906 = vmatpush1.bf16.xpose.msra.mxu0 0
        %907 = vmatprep.subr.bf16.mxu0 0
        %908 = vmatpush1.bf16.xpose.msra.mxu0 0
        %909 = vmatprep.subr.bf16.mxu0 0
        %910 = vmatpush1.bf16.xpose.msra.mxu0 0
        %911 = vmatprep.subr.bf16.mxu0 0
        %912 = vmatpush1.bf16.xpose.msra.mxu0 0
        %913 = vmatprep.subr.bf16.mxu0 0
        %914 = vmatpush1.bf16.xpose.msra.mxu0 0
        %915 = vmatprep.subr.bf16.mxu0 0
        %916 = vmatpush1.bf16.xpose.msra.mxu0 0
        %917 = vmatprep.subr.bf16.mxu0 0
        %918 = vmatpush1.bf16.xpose.msra.mxu0 0
        %919 = vmatprep.mubr.bf16.mxu0 0
        %920 = vmatmul.mubr.bf16.gmra.mrb[0].mxu0 %v882
        %v921 = vpop.f32.mrb[0].mxu0
        %v922 = vadd.f32 %v875, %v921
        %v923 = vpop.f32.mrb[0].mxu0
        %v924 = vpop.f32.mrb[0].mxu0
        %v925 = vpop.f32.mrb[0].mxu0
        %926 = vdwg.mxu0
        %v927 = vsel %vm880, %v922, -inf
        %928 = vmax.xlane.f32.xlu0 %v927
        %v929 = vpop.xlane.xlu0 %928
        %v930 = vsub.f32 %v922, %v929
        %v931 = vmul.f32 %v930, 1.442695
        %v932 = vpow.pop %v931
        %v933 = vsel %vm880, %v932, 0.0
        %934 = vadd.xlane.f32.xlu0 %v933
        %v935 = vpop.xlane.xlu0 %934
        %v936 = vrcp.pop %v935
        %v937 = vmul.f32 %v932, %v936
        %v939 = vlaneseq
        %v940 = vshrl.u32 %v939, 7
        %v941 = vsub.s32 0, %v940
        %v942 = vrot.slane %v764, %v941
        %v944 = vmul.f32 %v937, %v942
        %v945 = vpack.c.bf16 %v944, %v944
        %946 = vrot.lane.b32.xlu0 %v870, 64
        %v947 = vpop.permute.xlu0 %946
        %v949 = vsel %vm880, %v945, 0
        %vm951 = vcmask 1043456
        %v953 = vsel %vm951, %v947, 0
        %955 = vmatprep.subr.bf16.mxu0 0
        %956 = vmatpush1.bf16.msra.mxu0 %v953
        %957 = vmatprep.subr.bf16.mxu0 0
        %958 = vmatpush1.bf16.msra.mxu0 0
        %959 = vmatprep.subr.bf16.mxu0 0
        %960 = vmatpush1.bf16.msra.mxu0 0
        %961 = vmatprep.subr.bf16.mxu0 0
        %962 = vmatpush1.bf16.msra.mxu0 0
        %963 = vmatprep.subr.bf16.mxu0 0
        %964 = vmatpush1.bf16.msra.mxu0 0
        %965 = vmatprep.subr.bf16.mxu0 0
        %966 = vmatpush1.bf16.msra.mxu0 0
        %967 = vmatprep.subr.bf16.mxu0 0
        %968 = vmatpush1.bf16.msra.mxu0 0
        %969 = vmatprep.subr.bf16.mxu0 0
        %970 = vmatpush1.bf16.msra.mxu0 0
        %971 = vmatprep.subr.bf16.mxu0 0
        %972 = vmatpush1.bf16.msra.mxu0 0
        %973 = vmatprep.subr.bf16.mxu0 0
        %974 = vmatpush1.bf16.msra.mxu0 0
        %975 = vmatprep.subr.bf16.mxu0 0
        %976 = vmatpush1.bf16.msra.mxu0 0
        %977 = vmatprep.subr.bf16.mxu0 0
        %978 = vmatpush1.bf16.msra.mxu0 0
        %979 = vmatprep.subr.bf16.mxu0 0
        %980 = vmatpush1.bf16.msra.mxu0 0
        %981 = vmatprep.subr.bf16.mxu0 0
        %982 = vmatpush1.bf16.msra.mxu0 0
        %983 = vmatprep.subr.bf16.mxu0 0
        %984 = vmatpush1.bf16.msra.mxu0 0
        %985 = vmatprep.subr.bf16.mxu0 0
        %986 = vmatpush1.bf16.msra.mxu0 0
        %987 = vmatprep.mubr.bf16.mxu0 0
        %988 = vmatmul.mubr.bf16.gmra.mrb[0].mxu0 %v949
        %v989 = vpop.f32.mrb[0].mxu0
        %v990 = vadd.f32 0.0, %v989
        %v991 = vpop.f32.mrb[0].mxu0
        %v992 = vpop.f32.mrb[0].mxu0
        %v993 = vpop.f32.mrb[0].mxu0
        %994 = vdwg.mxu0
        %995 = vst.msk [vmem:[#allocation3] sm:$0xff] %vm880, %v990
        %v996 = vld [vmem:[#allocation2] sm:$0xff]
        %v997 = vmul.f32 %v996, 0.35355338
        %v998 = vpack.c.bf16 %v997, %v997
        %v999 = vpack.c.bf16 %v996, %v996
        %1001 = vrot.lane.b32.xlu0 %v998, 120
        %v1002 = vpop.permute.xlu0 %1001
        %1004 = vrot.lane.b32.xlu0 %v999, 88
        %v1005 = vpop.permute.xlu0 %1004
        %v1007 = vsel %vm880, %v1002, 0
        %v1010 = vsel %vm880, %v1005, 0
        %1012 = vmatprep.subr.bf16.mxu0 0
        %1013 = vmatpush1.bf16.xpose.msra.mxu0 %v1010
        %1014 = vmatprep.subr.bf16.mxu0 0
        %1015 = vmatpush1.bf16.xpose.msra.mxu0 0
        %1016 = vmatprep.subr.bf16.mxu0 0
        %1017 = vmatpush1.bf16.xpose.msra.mxu0 0
        %1018 = vmatprep.subr.bf16.mxu0 0
        %1019 = vmatpush1.bf16.xpose.msra.mxu0 0
        %1020 = vmatprep.subr.bf16.mxu0 0
        %1021 = vmatpush1.bf16.xpose.msra.mxu0 0
        %1022 = vmatprep.subr.bf16.mxu0 0
        %1023 = vmatpush1.bf16.xpose.msra.mxu0 0
        %1024 = vmatprep.subr.bf16.mxu0 0
        %1025 = vmatpush1.bf16.xpose.msra.mxu0 0
        %1026 = vmatprep.subr.bf16.mxu0 0
        %1027 = vmatpush1.bf16.xpose.msra.mxu0 0
        %1028 = vmatprep.subr.bf16.mxu0 0
        %1029 = vmatpush1.bf16.xpose.msra.mxu0 0
        %1030 = vmatprep.subr.bf16.mxu0 0
        %1031 = vmatpush1.bf16.xpose.msra.mxu0 0
        %1032 = vmatprep.subr.bf16.mxu0 0
        %1033 = vmatpush1.bf16.xpose.msra.mxu0 0
        %1034 = vmatprep.subr.bf16.mxu0 0
        %1035 = vmatpush1.bf16.xpose.msra.mxu0 0
        %1036 = vmatprep.subr.bf16.mxu0 0
        %1037 = vmatpush1.bf16.xpose.msra.mxu0 0
        %1038 = vmatprep.subr.bf16.mxu0 0
        %1039 = vmatpush1.bf16.xpose.msra.mxu0 0
        %1040 = vmatprep.subr.bf16.mxu0 0
        %1041 = vmatpush1.bf16.xpose.msra.mxu0 0
        %1042 = vmatprep.subr.bf16.mxu0 0
        %1043 = vmatpush1.bf16.xpose.msra.mxu0 0
        %1044 = vmatprep.mubr.bf16.mxu0 0
        %1045 = vmatmul.mubr.bf16.gmra.mrb[0].mxu0 %v1007
        %v1046 = vpop.f32.mrb[0].mxu0
        %v1047 = vadd.f32 %v875, %v1046
        %v1048 = vpop.f32.mrb[0].mxu0
        %v1049 = vpop.f32.mrb[0].mxu0
        %v1050 = vpop.f32.mrb[0].mxu0
        %1051 = vdwg.mxu0
        %v1052 = vsel %vm880, %v1047, -inf
        %1053 = vmax.xlane.f32.xlu0 %v1052
        %v1054 = vpop.xlane.xlu0 %1053
        %v1055 = vsub.f32 %v1047, %v1054
        %v1056 = vmul.f32 %v1055, 1.442695
        %v1057 = vpow.pop %v1056
        %v1058 = vsel %vm880, %v1057, 0.0
        %1059 = vadd.xlane.f32.xlu0 %v1058
        %v1060 = vpop.xlane.xlu0 %1059
        %v1061 = vrcp.pop %v1060
        %v1062 = vmul.f32 %v1057, %v1061
        %v1063 = vmul.f32 %v1062, %v942
        %v1064 = vpack.c.bf16 %v1063, %v1063
        %1065 = vrot.lane.b32.xlu0 %v999, 56
        %v1066 = vpop.permute.xlu0 %1065
        %v1068 = vsel %vm880, %v1064, 0
        %v1071 = vsel %vm951, %v1066, 0
        %1073 = vmatprep.subr.bf16.mxu0 0
        %1074 = vmatpush1.bf16.msra.mxu0 %v1071
        %1075 = vmatprep.subr.bf16.mxu0 0
        %1076 = vmatpush1.bf16.msra.mxu0 0
        %1077 = vmatprep.subr.bf16.mxu0 0
        %1078 = vmatpush1.bf16.msra.mxu0 0
        %1079 = vmatprep.subr.bf16.mxu0 0
        %1080 = vmatpush1.bf16.msra.mxu0 0
        %1081 = vmatprep.subr.bf16.mxu0 0
        %1082 = vmatpush1.bf16.msra.mxu0 0
        %1083 = vmatprep.subr.bf16.mxu0 0
        %1084 = vmatpush1.bf16.msra.mxu0 0
        %1085 = vmatprep.subr.bf16.mxu0 0
        %1086 = vmatpush1.bf16.msra.mxu0 0
        %1087 = vmatprep.subr.bf16.mxu0 0
        %1088 = vmatpush1.bf16.msra.mxu0 0
        %1089 = vmatprep.subr.bf16.mxu0 0
        %1090 = vmatpush1.bf16.msra.mxu0 0
        %1091 = vmatprep.subr.bf16.mxu0 0
        %1092 = vmatpush1.bf16.msra.mxu0 0
        %1093 = vmatprep.subr.bf16.mxu0 0
        %1094 = vmatpush1.bf16.msra.mxu0 0
        %1095 = vmatprep.subr.bf16.mxu0 0
        %1096 = vmatpush1.bf16.msra.mxu0 0
        %1097 = vmatprep.subr.bf16.mxu0 0
        %1098 = vmatpush1.bf16.msra.mxu0 0
        %1099 = vmatprep.subr.bf16.mxu0 0
        %1100 = vmatpush1.bf16.msra.mxu0 0
        %1101 = vmatprep.subr.bf16.mxu0 0
        %1102 = vmatpush1.bf16.msra.mxu0 0
        %1103 = vmatprep.subr.bf16.mxu0 0
        %1104 = vmatpush1.bf16.msra.mxu0 0
        %1105 = vmatprep.mubr.bf16.mxu0 0
        %1106 = vmatmul.mubr.bf16.gmra.mrb[0].mxu0 %v1068
        %v1107 = vpop.f32.mrb[0].mxu0
        %v1108 = vadd.f32 0.0, %v1107
        %v1109 = vpop.f32.mrb[0].mxu0
        %v1110 = vpop.f32.mrb[0].mxu0
        %v1111 = vpop.f32.mrb[0].mxu0
        %1112 = vdwg.mxu0
        %1114 = vrot.lane.b32.xlu0 %v1108, 8
        %v1115 = vpop.permute.xlu0 %1114
        %vm1117 = vcmask 130112
        %1118 = vst.msk [vmem:[#allocation3] sm:$0xff] %vm1117, %v1115
        %v1119 = vld [vmem:[#allocation2] sm:$0xff]
        %v1120 = vmul.f32 %v1119, 0.35355338
        %v1121 = vpack.c.bf16 %v1120, %v1120
        %v1122 = vpack.c.bf16 %v1119, %v1119
        %1124 = vrot.lane.b32.xlu0 %v1121, 112
        %v1125 = vpop.permute.xlu0 %1124
        %1127 = vrot.lane.b32.xlu0 %v1122, 80
        %v1128 = vpop.permute.xlu0 %1127
        %v1130 = vsel %vm880, %v1125, 0
        %v1133 = vsel %vm880, %v1128, 0
        %1135 = vmatprep.subr.bf16.mxu0 0
        %1136 = vmatpush1.bf16.xpose.msra.mxu0 %v1133
        %1137 = vmatprep.subr.bf16.mxu0 0
        %1138 = vmatpush1.bf16.xpose.msra.mxu0 0
        %1139 = vmatprep.subr.bf16.mxu0 0
        %1140 = vmatpush1.bf16.xpose.msra.mxu0 0
        %1141 = vmatprep.subr.bf16.mxu0 0
        %1142 = vmatpush1.bf16.xpose.msra.mxu0 0
        %1143 = vmatprep.subr.bf16.mxu0 0
        %1144 = vmatpush1.bf16.xpose.msra.mxu0 0
        %1145 = vmatprep.subr.bf16.mxu0 0
        %1146 = vmatpush1.bf16.xpose.msra.mxu0 0
        %1147 = vmatprep.subr.bf16.mxu0 0
        %1148 = vmatpush1.bf16.xpose.msra.mxu0 0
        %1149 = vmatprep.subr.bf16.mxu0 0
        %1150 = vmatpush1.bf16.xpose.msra.mxu0 0
        %1151 = vmatprep.subr.bf16.mxu0 0
        %1152 = vmatpush1.bf16.xpose.msra.mxu0 0
        %1153 = vmatprep.subr.bf16.mxu0 0
        %1154 = vmatpush1.bf16.xpose.msra.mxu0 0
        %1155 = vmatprep.subr.bf16.mxu0 0
        %1156 = vmatpush1.bf16.xpose.msra.mxu0 0
        %1157 = vmatprep.subr.bf16.mxu0 0
        %1158 = vmatpush1.bf16.xpose.msra.mxu0 0
        %1159 = vmatprep.subr.bf16.mxu0 0
        %1160 = vmatpush1.bf16.xpose.msra.mxu0 0
        %1161 = vmatprep.subr.bf16.mxu0 0
        %1162 = vmatpush1.bf16.xpose.msra.mxu0 0
        %1163 = vmatprep.subr.bf16.mxu0 0
        %1164 = vmatpush1.bf16.xpose.msra.mxu0 0
        %1165 = vmatprep.subr.bf16.mxu0 0
        %1166 = vmatpush1.bf16.xpose.msra.mxu0 0
        %1167 = vmatprep.mubr.bf16.mxu0 0
        %1168 = vmatmul.mubr.bf16.gmra.mrb[0].mxu0 %v1130
        %v1169 = vpop.f32.mrb[0].mxu0
        %v1170 = vadd.f32 %v875, %v1169
        %v1171 = vpop.f32.mrb[0].mxu0
        %v1172 = vpop.f32.mrb[0].mxu0
        %v1173 = vpop.f32.mrb[0].mxu0
        %1174 = vdwg.mxu0
        %v1175 = vsel %vm880, %v1170, -inf
        %1176 = vmax.xlane.f32.xlu0 %v1175
        %v1177 = vpop.xlane.xlu0 %1176
        %v1178 = vsub.f32 %v1170, %v1177
        %v1179 = vmul.f32 %v1178, 1.442695
        %v1180 = vpow.pop %v1179
        %v1181 = vsel %vm880, %v1180, 0.0
        %1182 = vadd.xlane.f32.xlu0 %v1181
        %v1183 = vpop.xlane.xlu0 %1182
        %v1184 = vrcp.pop %v1183
        %v1185 = vmul.f32 %v1180, %v1184
        %v1186 = vmul.f32 %v1185, %v942
        %v1187 = vpack.c.bf16 %v1186, %v1186
        %1188 = vrot.lane.b32.xlu0 %v1122, 48
        %v1189 = vpop.permute.xlu0 %1188
        %v1191 = vsel %vm880, %v1187, 0
        %v1194 = vsel %vm951, %v1189, 0
        %1196 = vmatprep.subr.bf16.mxu0 0
        %1197 = vmatpush1.bf16.msra.mxu0 %v1194
        %1198 = vmatprep.subr.bf16.mxu0 0
        %1199 = vmatpush1.bf16.msra.mxu0 0
        %1200 = vmatprep.subr.bf16.mxu0 0
        %1201 = vmatpush1.bf16.msra.mxu0 0
        %1202 = vmatprep.subr.bf16.mxu0 0
        %1203 = vmatpush1.bf16.msra.mxu0 0
        %1204 = vmatprep.subr.bf16.mxu0 0
        %1205 = vmatpush1.bf16.msra.mxu0 0
        %1206 = vmatprep.subr.bf16.mxu0 0
        %1207 = vmatpush1.bf16.msra.mxu0 0
        %1208 = vmatprep.subr.bf16.mxu0 0
        %1209 = vmatpush1.bf16.msra.mxu0 0
        %1210 = vmatprep.subr.bf16.mxu0 0
        %1211 = vmatpush1.bf16.msra.mxu0 0
        %1212 = vmatprep.subr.bf16.mxu0 0
        %1213 = vmatpush1.bf16.msra.mxu0 0
        %1214 = vmatprep.subr.bf16.mxu0 0
        %1215 = vmatpush1.bf16.msra.mxu0 0
        %1216 = vmatprep.subr.bf16.mxu0 0
        %1217 = vmatpush1.bf16.msra.mxu0 0
        %1218 = vmatprep.subr.bf16.mxu0 0
        %1219 = vmatpush1.bf16.msra.mxu0 0
        %1220 = vmatprep.subr.bf16.mxu0 0
        %1221 = vmatpush1.bf16.msra.mxu0 0
        %1222 = vmatprep.subr.bf16.mxu0 0
        %1223 = vmatpush1.bf16.msra.mxu0 0
        %1224 = vmatprep.subr.bf16.mxu0 0
        %1225 = vmatpush1.bf16.msra.mxu0 0
        %1226 = vmatprep.subr.bf16.mxu0 0
        %1227 = vmatpush1.bf16.msra.mxu0 0
        %1228 = vmatprep.mubr.bf16.mxu0 0
        %1229 = vmatmul.mubr.bf16.gmra.mrb[0].mxu0 %v1191
        %v1230 = vpop.f32.mrb[0].mxu0
        %v1231 = vadd.f32 0.0, %v1230
        %v1232 = vpop.f32.mrb[0].mxu0
        %v1233 = vpop.f32.mrb[0].mxu0
        %v1234 = vpop.f32.mrb[0].mxu0
        %1235 = vdwg.mxu0
        %1237 = vrot.lane.b32.xlu0 %v1231, 16
        %v1238 = vpop.permute.xlu0 %1237
        %vm1240 = vcmask 195712
        %1241 = vst.msk [vmem:[#allocation3] sm:$0xff] %vm1240, %v1238
        %v1242 = vld [vmem:[#allocation2] sm:$0xff]
        %v1243 = vmul.f32 %v1242, 0.35355338
        %v1244 = vpack.c.bf16 %v1243, %v1243
        %v1245 = vpack.c.bf16 %v1242, %v1242
        %1247 = vrot.lane.b32.xlu0 %v1244, 104
        %v1248 = vpop.permute.xlu0 %1247
        %1250 = vrot.lane.b32.xlu0 %v1245, 72
        %v1251 = vpop.permute.xlu0 %1250
        %v1253 = vsel %vm880, %v1248, 0
        %v1256 = vsel %vm880, %v1251, 0
        %1258 = vmatprep.subr.bf16.mxu0 0
        %1259 = vmatpush1.bf16.xpose.msra.mxu0 %v1256
        %1260 = vmatprep.subr.bf16.mxu0 0
        %1261 = vmatpush1.bf16.xpose.msra.mxu0 0
        %1262 = vmatprep.subr.bf16.mxu0 0
        %1263 = vmatpush1.bf16.xpose.msra.mxu0 0
        %1264 = vmatprep.subr.bf16.mxu0 0
        %1265 = vmatpush1.bf16.xpose.msra.mxu0 0
        %1266 = vmatprep.subr.bf16.mxu0 0
        %1267 = vmatpush1.bf16.xpose.msra.mxu0 0
        %1268 = vmatprep.subr.bf16.mxu0 0
        %1269 = vmatpush1.bf16.xpose.msra.mxu0 0
        %1270 = vmatprep.subr.bf16.mxu0 0
        %1271 = vmatpush1.bf16.xpose.msra.mxu0 0
        %1272 = vmatprep.subr.bf16.mxu0 0
        %1273 = vmatpush1.bf16.xpose.msra.mxu0 0
        %1274 = vmatprep.subr.bf16.mxu0 0
        %1275 = vmatpush1.bf16.xpose.msra.mxu0 0
        %1276 = vmatprep.subr.bf16.mxu0 0
        %1277 = vmatpush1.bf16.xpose.msra.mxu0 0
        %1278 = vmatprep.subr.bf16.mxu0 0
        %1279 = vmatpush1.bf16.xpose.msra.mxu0 0
        %1280 = vmatprep.subr.bf16.mxu0 0
        %1281 = vmatpush1.bf16.xpose.msra.mxu0 0
        %1282 = vmatprep.subr.bf16.mxu0 0
        %1283 = vmatpush1.bf16.xpose.msra.mxu0 0
        %1284 = vmatprep.subr.bf16.mxu0 0
        %1285 = vmatpush1.bf16.xpose.msra.mxu0 0
        %1286 = vmatprep.subr.bf16.mxu0 0
        %1287 = vmatpush1.bf16.xpose.msra.mxu0 0
        %1288 = vmatprep.subr.bf16.mxu0 0
        %1289 = vmatpush1.bf16.xpose.msra.mxu0 0
        %1290 = vmatprep.mubr.bf16.mxu0 0
        %1291 = vmatmul.mubr.bf16.gmra.mrb[0].mxu0 %v1253
        %v1292 = vpop.f32.mrb[0].mxu0
        %v1293 = vadd.f32 %v875, %v1292
        %v1294 = vpop.f32.mrb[0].mxu0
        %v1295 = vpop.f32.mrb[0].mxu0
        %v1296 = vpop.f32.mrb[0].mxu0
        %1297 = vdwg.mxu0
        %v1298 = vsel %vm880, %v1293, -inf
        %1299 = vmax.xlane.f32.xlu0 %v1298
        %v1300 = vpop.xlane.xlu0 %1299
        %v1301 = vsub.f32 %v1293, %v1300
        %v1302 = vmul.f32 %v1301, 1.442695
        %v1303 = vpow.pop %v1302
        %v1304 = vsel %vm880, %v1303, 0.0
        %1305 = vadd.xlane.f32.xlu0 %v1304
        %v1306 = vpop.xlane.xlu0 %1305
        %v1307 = vrcp.pop %v1306
        %v1308 = vmul.f32 %v1303, %v1307
        %v1309 = vmul.f32 %v1308, %v942
        %v1310 = vpack.c.bf16 %v1309, %v1309
        %1311 = vrot.lane.b32.xlu0 %v1245, 40
        %v1312 = vpop.permute.xlu0 %1311
        %v1314 = vsel %vm880, %v1310, 0
        %v1317 = vsel %vm951, %v1312, 0
        %1319 = vmatprep.subr.bf16.mxu0 0
        %1320 = vmatpush1.bf16.msra.mxu0 %v1317
        %1321 = vmatprep.subr.bf16.mxu0 0
        %1322 = vmatpush1.bf16.msra.mxu0 0
        %1323 = vmatprep.subr.bf16.mxu0 0
        %1324 = vmatpush1.bf16.msra.mxu0 0
        %1325 = vmatprep.subr.bf16.mxu0 0
        %1326 = vmatpush1.bf16.msra.mxu0 0
        %1327 = vmatprep.subr.bf16.mxu0 0
        %1328 = vmatpush1.bf16.msra.mxu0 0
        %1329 = vmatprep.subr.bf16.mxu0 0
        %1330 = vmatpush1.bf16.msra.mxu0 0
        %1331 = vmatprep.subr.bf16.mxu0 0
        %1332 = vmatpush1.bf16.msra.mxu0 0
        %1333 = vmatprep.subr.bf16.mxu0 0
        %1334 = vmatpush1.bf16.msra.mxu0 0
        %1335 = vmatprep.subr.bf16.mxu0 0
        %1336 = vmatpush1.bf16.msra.mxu0 0
        %1337 = vmatprep.subr.bf16.mxu0 0
        %1338 = vmatpush1.bf16.msra.mxu0 0
        %1339 = vmatprep.subr.bf16.mxu0 0
        %1340 = vmatpush1.bf16.msra.mxu0 0
        %1341 = vmatprep.subr.bf16.mxu0 0
        %1342 = vmatpush1.bf16.msra.mxu0 0
        %1343 = vmatprep.subr.bf16.mxu0 0
        %1344 = vmatpush1.bf16.msra.mxu0 0
        %1345 = vmatprep.subr.bf16.mxu0 0
        %1346 = vmatpush1.bf16.msra.mxu0 0
        %1347 = vmatprep.subr.bf16.mxu0 0
        %1348 = vmatpush1.bf16.msra.mxu0 0
        %1349 = vmatprep.subr.bf16.mxu0 0
        %1350 = vmatpush1.bf16.msra.mxu0 0
        %1351 = vmatprep.mubr.bf16.mxu0 0
        %1352 = vmatmul.mubr.bf16.gmra.mrb[0].mxu0 %v1314
        %v1353 = vpop.f32.mrb[0].mxu0
        %v1354 = vadd.f32 0.0, %v1353
        %v1355 = vpop.f32.mrb[0].mxu0
        %v1356 = vpop.f32.mrb[0].mxu0
        %v1357 = vpop.f32.mrb[0].mxu0
        %1358 = vdwg.mxu0
        %1360 = vrot.lane.b32.xlu0 %v1354, 24
        %v1361 = vpop.permute.xlu0 %1360
        %vm1363 = vcmask 261312
        %1364 = vst.msk [vmem:[#allocation3] sm:$0xff] %vm1363, %v1361
        %v1365 = vld [vmem:[#allocation3] sm:$0xff]
        %v1366 = vpack.c.bf16 %v1365, %v1365
        %v1367 = vld [vmem:[%s723] sm:$0xf]
        %v1368 = vld [vmem:[%s723 + $0x4] sm:$0xf]
        %v1369 = vld [vmem:[%s723 + $0x8] sm:$0xf]
        %v1370 = vld [vmem:[%s723 + $0xc] sm:$0xf]
        %v1371 = vld [vmem:[%s726] sm:$0x1]
        %v1373 = vlaneseq
        %v1374 = vshrl.u32 %v1373, 7
        %v1375 = vsub.s32 0, %v1374
        %v1376 = vrot.slane %v1371, %v1375
        %v1382 = vunpack.c.l.b16 %v1367
        %v1383 = vunpack.c.l.b16 %v1368
        %v1384 = vunpack.c.l.b16 %v1369
        %v1385 = vunpack.c.l.b16 %v1370
        %v1386 = vpack.c.b16 %v1383, %v1382
        %v1387 = vpack.c.b16 %v1385, %v1384
        %v1391 = vsel %vm769, %v1366, 0
        %1393 = vmatprep.subr.bf16.mxu0 0
        %1394 = vmatpush1.bf16.msra.mxu0 %v1386
        %1395 = vmatprep.subr.bf16.mxu0 0
        %1396 = vmatpush1.bf16.msra.mxu0 %v1387
        %1397 = vmatprep.subr.bf16.mxu0 0
        %1398 = vmatpush1.bf16.msra.mxu0 0
        %1399 = vmatprep.subr.bf16.mxu0 0
        %1400 = vmatpush1.bf16.msra.mxu0 0
        %1401 = vmatprep.subr.bf16.mxu0 0
        %1402 = vmatpush1.bf16.msra.mxu0 0
        %1403 = vmatprep.subr.bf16.mxu0 0
        %1404 = vmatpush1.bf16.msra.mxu0 0
        %1405 = vmatprep.subr.bf16.mxu0 0
        %1406 = vmatpush1.bf16.msra.mxu0 0
        %1407 = vmatprep.subr.bf16.mxu0 0
        %1408 = vmatpush1.bf16.msra.mxu0 0
        %1409 = vmatprep.subr.bf16.mxu0 0
        %1410 = vmatpush1.bf16.msra.mxu0 0
        %1411 = vmatprep.subr.bf16.mxu0 0
        %1412 = vmatpush1.bf16.msra.mxu0 0
        %1413 = vmatprep.subr.bf16.mxu0 0
        %1414 = vmatpush1.bf16.msra.mxu0 0
        %1415 = vmatprep.subr.bf16.mxu0 0
        %1416 = vmatpush1.bf16.msra.mxu0 0
        %1417 = vmatprep.subr.bf16.mxu0 0
        %1418 = vmatpush1.bf16.msra.mxu0 0
        %1419 = vmatprep.subr.bf16.mxu0 0
        %1420 = vmatpush1.bf16.msra.mxu0 0
        %1421 = vmatprep.subr.bf16.mxu0 0
        %1422 = vmatpush1.bf16.msra.mxu0 0
        %1423 = vmatprep.subr.bf16.mxu0 0
        %1424 = vmatpush1.bf16.msra.mxu0 0
        %1425 = vmatprep.mubr.bf16.mxu0 0
        %1426 = vmatmul.mubr.bf16.gmra.mrb[0].mxu0 %v1391
        %v1427 = vpop.f32.mrb[0].mxu0
        %v1428 = vadd.f32 %v1376, %v1427
        %v1429 = vpop.f32.mrb[0].mxu0
        %v1430 = vpop.f32.mrb[0].mxu0
        %v1431 = vpop.f32.mrb[0].mxu0
        %1432 = vdwg.mxu0
        %v1433 = vadd.f32 %v763, %v1428
        %v1434 = vld [vmem:[%s751] sm:$0x1]
        %v1435 = vld [vmem:[%s754] sm:$0x1]
        %v1436 = vsel %vm769, %v1433, 0.0
        %1437 = vadd.xlane.f32.xlu0 %v1436
        %v1438 = vpop.xlane.xlu0 %1437
        %v1439 = vmul.f32 %v1438, %v773
        %v1440 = vsub.f32 %v1433, %v1439
        %v1441 = vmul.f32 %v1440, %v1440
        %v1442 = vsel %vm769, %v1441, 0.0
        %1443 = vadd.xlane.f32.xlu0 %v1442
        %v1444 = vpop.xlane.xlu0 %1443
        %v1445 = vmul.f32 %v1444, %v773
        %v1446 = vadd.f32 %v1445, 1e-12
        %v1447 = vrsqrt.pop %v1446
        %v1448 = vmul.f32 %v1440, %v1447
        %v1450 = vlaneseq
        %v1451 = vshrl.u32 %v1450, 7
        %v1452 = vsub.s32 0, %v1451
        %v1453 = vrot.slane %v1434, %v1452
        %v1455 = vmul.f32 %v1448, %v1453
        %v1457 = vlaneseq
        %v1458 = vshrl.u32 %v1457, 7
        %v1459 = vsub.s32 0, %v1458
        %v1460 = vrot.slane %v1435, %v1459
        %v1462 = vadd.f32 %v1455, %v1460
        %v1463 = vpack.c.bf16 %v1462, %v1462
        %v1464 = vld [vmem:[%s731] sm:$0xf]
        %v1465 = vld [vmem:[%s731 + $0x4] sm:$0xf]
        %v1466 = vld [vmem:[%s731 + $0x8] sm:$0xf]
        %v1467 = vld [vmem:[%s731 + $0xc] sm:$0xf]
        %v1468 = vld [vmem:[%s734] sm:$0x1]
        %v1470 = vlaneseq
        %v1471 = vshrl.u32 %v1470, 7
        %v1472 = vsub.s32 0, %v1471
        %v1473 = vrot.slane %v1468, %v1472
        %v1479 = vunpack.c.l.b16 %v1464
        %v1480 = vunpack.c.l.b16 %v1465
        %v1481 = vunpack.c.l.b16 %v1466
        %v1482 = vunpack.c.l.b16 %v1467
        %v1483 = vpack.c.b16 %v1480, %v1479
        %v1484 = vpack.c.b16 %v1482, %v1481
        %v1488 = vsel %vm769, %v1463, 0
        %1490 = vmatprep.subr.bf16.mxu0 0
        %1491 = vmatpush1.bf16.msra.mxu0 %v1483
        %1492 = vmatprep.subr.bf16.mxu0 0
        %1493 = vmatpush1.bf16.msra.mxu0 %v1484
        %1494 = vmatprep.subr.bf16.mxu0 0
        %1495 = vmatpush1.bf16.msra.mxu0 0
        %1496 = vmatprep.subr.bf16.mxu0 0
        %1497 = vmatpush1.bf16.msra.mxu0 0
        %1498 = vmatprep.subr.bf16.mxu0 0
        %1499 = vmatpush1.bf16.msra.mxu0 0
        %1500 = vmatprep.subr.bf16.mxu0 0
        %1501 = vmatpush1.bf16.msra.mxu0 0
        %1502 = vmatprep.subr.bf16.mxu0 0
        %1503 = vmatpush1.bf16.msra.mxu0 0
        %1504 = vmatprep.subr.bf16.mxu0 0
        %1505 = vmatpush1.bf16.msra.mxu0 0
        %1506 = vmatprep.subr.bf16.mxu0 0
        %1507 = vmatpush1.bf16.msra.mxu0 0
        %1508 = vmatprep.subr.bf16.mxu0 0
        %1509 = vmatpush1.bf16.msra.mxu0 0
        %1510 = vmatprep.subr.bf16.mxu0 0
        %1511 = vmatpush1.bf16.msra.mxu0 0
        %1512 = vmatprep.subr.bf16.mxu0 0
        %1513 = vmatpush1.bf16.msra.mxu0 0
        %1514 = vmatprep.subr.bf16.mxu0 0
        %1515 = vmatpush1.bf16.msra.mxu0 0
        %1516 = vmatprep.subr.bf16.mxu0 0
        %1517 = vmatpush1.bf16.msra.mxu0 0
        %1518 = vmatprep.subr.bf16.mxu0 0
        %1519 = vmatpush1.bf16.msra.mxu0 0
        %1520 = vmatprep.subr.bf16.mxu0 0
        %1521 = vmatpush1.bf16.msra.mxu0 0
        %1522 = vmatprep.mubr.bf16.mxu0 0
        %1523 = vmatmul.mubr.bf16.gmra.mrb[0].mxu0 %v1488
        %v1524 = vpop.f32.mrb[0].mxu0
        %v1525 = vadd.f32 %v1473, %v1524
        %v1526 = vpop.f32.mrb[0].mxu0
        %v1527 = vpop.f32.mrb[0].mxu0
        %v1528 = vpop.f32.mrb[0].mxu0
        %1529 = vdwg.mxu0
        %v1530 = vmax.f32 %v1525, 0.0
        %v1531 = vpack.c.bf16 %v1530, %v1530
        %v1532 = vld [vmem:[%s739] sm:$0xf]
        %v1533 = vld [vmem:[%s739 + $0x4] sm:$0xf]
        %v1534 = vld [vmem:[%s739 + $0x8] sm:$0xf]
        %v1535 = vld [vmem:[%s739 + $0xc] sm:$0xf]
        %v1536 = vld [vmem:[%s739 + $0x10] sm:$0xf]
        %v1537 = vld [vmem:[%s739 + $0x14] sm:$0xf]
        %v1538 = vld [vmem:[%s739 + $0x18] sm:$0xf]
        %v1539 = vld [vmem:[%s739 + $0x1c] sm:$0xf]
        %v1540 = vld [vmem:[%s742] sm:$0x1]
        %v1542 = vlaneseq
        %v1543 = vshrl.u32 %v1542, 7
        %v1544 = vsub.s32 0, %v1543
        %v1545 = vrot.slane %v1540, %v1544
        %v1555 = vunpack.c.l.b16 %v1532
        %v1556 = vunpack.c.l.b16 %v1533
        %v1557 = vunpack.c.l.b16 %v1534
        %v1558 = vunpack.c.l.b16 %v1535
        %v1559 = vunpack.c.l.b16 %v1536
        %v1560 = vunpack.c.l.b16 %v1537
        %v1561 = vunpack.c.l.b16 %v1538
        %v1562 = vunpack.c.l.b16 %v1539
        %v1563 = vpack.c.b16 %v1556, %v1555
        %v1564 = vpack.c.b16 %v1558, %v1557
        %v1565 = vpack.c.b16 %v1560, %v1559
        %v1566 = vpack.c.b16 %v1562, %v1561
        %vm1571 = vcmask 523264
        %v1573 = vsel %vm1571, %v1531, 0
        %1575 = vmatprep.subr.bf16.mxu0 0
        %1576 = vmatpush1.bf16.msra.mxu0 %v1563
        %1577 = vmatprep.subr.bf16.mxu0 0
        %1578 = vmatpush1.bf16.msra.mxu0 %v1564
        %1579 = vmatprep.subr.bf16.mxu0 0
        %1580 = vmatpush1.bf16.msra.mxu0 %v1565
        %1581 = vmatprep.subr.bf16.mxu0 0
        %1582 = vmatpush1.bf16.msra.mxu0 %v1566
        %1583 = vmatprep.subr.bf16.mxu0 0
        %1584 = vmatpush1.bf16.msra.mxu0 0
        %1585 = vmatprep.subr.bf16.mxu0 0
        %1586 = vmatpush1.bf16.msra.mxu0 0
        %1587 = vmatprep.subr.bf16.mxu0 0
        %1588 = vmatpush1.bf16.msra.mxu0 0
        %1589 = vmatprep.subr.bf16.mxu0 0
        %1590 = vmatpush1.bf16.msra.mxu0 0
        %1591 = vmatprep.subr.bf16.mxu0 0
        %1592 = vmatpush1.bf16.msra.mxu0 0
        %1593 = vmatprep.subr.bf16.mxu0 0
        %1594 = vmatpush1.bf16.msra.mxu0 0
        %1595 = vmatprep.subr.bf16.mxu0 0
        %1596 = vmatpush1.bf16.msra.mxu0 0
        %1597 = vmatprep.subr.bf16.mxu0 0
        %1598 = vmatpush1.bf16.msra.mxu0 0
        %1599 = vmatprep.subr.bf16.mxu0 0
        %1600 = vmatpush1.bf16.msra.mxu0 0
        %1601 = vmatprep.subr.bf16.mxu0 0
        %1602 = vmatpush1.bf16.msra.mxu0 0
        %1603 = vmatprep.subr.bf16.mxu0 0
        %1604 = vmatpush1.bf16.msra.mxu0 0
        %1605 = vmatprep.subr.bf16.mxu0 0
        %1606 = vmatpush1.bf16.msra.mxu0 0
        %1607 = vmatprep.mubr.bf16.mxu0 0
        %1608 = vmatmul.mubr.bf16.gmra.mrb[0].mxu0 %v1573
        %v1609 = vpop.f32.mrb[0].mxu0
        %v1610 = vadd.f32 %v1545, %v1609
        %v1611 = vpop.f32.mrb[0].mxu0
        %v1612 = vpop.f32.mrb[0].mxu0
        %v1613 = vpop.f32.mrb[0].mxu0
        %1614 = vdwg.mxu0
        %v1615 = vadd.f32 %v1433, %v1610
        %p1616 = scmp.ne.s32.totalorder %s38, 1
        // Predicated region
        $region93: #{tpu_custom_call.1} parent=83 // pred_check
          %p1617 = pneg %p1616
        $region94: #{tpu_custom_call.1} parent=83 // pred_check_branch
          %1619 = sbr.rel (%p1617) target = $region96
        $region95: #{tpu_custom_call.1} parent=83 // pred_region
          %1620 = vst.msk [vmem:[%s707] sm:$0xff] %vm769, %v1615
        $region96: #{tpu_custom_call.1} parent=83 // pred_fallthru
          _
        %p1621 = scmp.eq.s32.totalorder %s38, 1
        // Predicated region
        $region97: #{tpu_custom_call.1} parent=83 // pred_check
          %p1622 = pneg %p1621
        $region98: #{tpu_custom_call.1} parent=83 // pred_check_branch
          %1624 = sbr.rel (%p1622) target = $region100
        $region99: #{tpu_custom_call.1} parent=83 // pred_region
          %v1625 = vld [vmem:[%s14] sm:$0x1]
          %v1626 = vld [vmem:[%s15] sm:$0x1]
          %v1627 = vsel %vm769, %v1615, 0.0
          %1628 = vadd.xlane.f32.xlu0 %v1627
          %v1629 = vpop.xlane.xlu0 %1628
          %v1630 = vmul.f32 %v1629, %v773
          %v1631 = vsub.f32 %v1615, %v1630
          %v1632 = vmul.f32 %v1631, %v1631
          %v1633 = vsel %vm769, %v1632, 0.0
          %1634 = vadd.xlane.f32.xlu0 %v1633
          %v1635 = vpop.xlane.xlu0 %1634
          %v1636 = vmul.f32 %v1635, %v773
          %v1637 = vadd.f32 %v1636, 1e-12
          %v1638 = vrsqrt.pop %v1637
          %v1639 = vmul.f32 %v1631, %v1638
          %v1641 = vlaneseq
          %v1642 = vshrl.u32 %v1641, 7
          %v1643 = vsub.s32 0, %v1642
          %v1644 = vrot.slane %v1625, %v1643
          %v1646 = vmul.f32 %v1639, %v1644
          %v1648 = vlaneseq
          %v1649 = vshrl.u32 %v1648, 7
          %v1650 = vsub.s32 0, %v1649
          %v1651 = vrot.slane %v1626, %v1650
          %v1653 = vadd.f32 %v1646, %v1651
          %1654 = vst.msk [vmem:[%s707] sm:$0xff] %vm769, %v1653
        $region100: #{tpu_custom_call.1} parent=83 // pred_fallthru
          _
        %s1655 = sand.u32 %s459, 1
        %s1656 = scalar_lea.sflag [#allocation6], %s1655
        %s1657 = sand.u32 %s459, 1
        %s1658 = smul.addr %s1657, 8
        %s1659 = scalar_lea.vmem [#allocation7], %s1658
        // Predicated region
        $region101: #{tpu_custom_call.1} parent=83 // pred_check
          %p1660 = pneg %p469
        $region102: #{tpu_custom_call.1} parent=83 // pred_check_branch
          %1662 = sbr.rel (%p1660) target = $region104
        $region103: #{tpu_custom_call.1} parent=83 // pred_region
          %s1664 = ssub.s32 128, 128
          %1665 = vsyncadd %s1656, %s1664
          %s1666 = smul.addr %s37, 128
          %s1667 = scalar_lea.hbm %s16, %s1666
          %s1669 = sshll.u32 %s1659, 4
          %s1670 = int_to_ptr.vmem [resolvable:$true] %s1669
          %1672 = dma.vmem_to_hbm [thread:$0]  %s1670, 128, %s1667, %s1656
        $region104: #{tpu_custom_call.1} parent=83 // pred_fallthru
          _
      $region84: #{tpu_custom_call.1} parent=5 // pred_fallthru
        _
      %p1673 = scmp.le.s32.totalorder 2, %s28
      // Predicated region
      $region105: #{tpu_custom_call.1} parent=5 // pred_check
        %p1674 = pneg %p1673
      $region106: #{tpu_custom_call.1} parent=5 // pred_check_branch
        %1676 = sbr.rel (%p1674) target = $region108
      $region107: #{tpu_custom_call.1} parent=5 // pred_region
        %s1677 = ssub.s32 %s28, 2
        // Predicated region
        $region109: #{tpu_custom_call.1} parent=107 // pred_check
          %p1678 = pneg %p475
        $region110: #{tpu_custom_call.1} parent=107 // pred_check_branch
          %1680 = sbr.rel (%p1678) target = $region112
        $region111: #{tpu_custom_call.1} parent=107 // pred_region
          %s1681 = sand.u32 %s460, 1
          %s1682 = scalar_lea.sflag [#allocation6], %s1681
          %s1683 = sand.u32 %s460, 1
          %s1684 = smul.addr %s1683, 8
          %s1685 = scalar_lea.vmem [#allocation7], %s1684
          %1686 = dma.done %s1682, 128
        $region112: #{tpu_custom_call.1} parent=107 // pred_fallthru
          _
      $region108: #{tpu_custom_call.1} parent=5 // pred_fallthru
        _
    $region6: #{tpu_custom_call.1} parent=1 // loop_footer
      %s32 = sadd.s32 1, %s28
    $region7: #{tpu_custom_call.1} parent=1 // loop_footer_branch
      %27 = sbr.rel target = $region3
    $region8: #{tpu_custom_call.1} parent=1 // loop_exit
      _
    %1687 = vsyncpa [#allocation5], 1
    %s1688 = scalar_lea.sflag [#allocation5], 1
    %1689 = vsyncpa %s1688, 1
    %1690 = vsyncpa [#allocation6], 1
    %s1691 = scalar_lea.sflag [#allocation6], 1
    %1692 = vsyncpa %s1691, 1

</llo_original>
